<compile_context>
chip_gen: v6e
topology: v6e:2x2x1
jax: 0.10.0
libtpu: 0.0.40
codegen_flags: <defaults>
</compile_context>

<pallas_src>
import functools
import math

import jax
import jax.numpy as jnp
from jax.experimental import pallas as pl
from jax.experimental.pallas import tpu as pltpu


def _round_up(x, m):
    return ((x + m - 1) // m) * m


def _cdiv(a, b):
    return -(-a // b)


# ---------------------------------------------------------------------------
# Shared attention core.
#   q [Bb, tq, E] bf16, k [Bb, S_pad, E] bf16, v [Bb, S_pad, Do] bf16 -> out_ref [Bb, tq, Do]
# Softmax in f32 with max subtraction; the 1/l normalization is folded into the (much
# smaller) P@V result; denominator reciprocal runs on the EUP slot.
# ---------------------------------------------------------------------------
def _attention_core(q, k, v, out_ref, *, s_actual, s_pad):
    scores = jnp.einsum("bqe,bke->bqk", q, k,
                        preferred_element_type=jnp.float32)          # [Bb, tq, S_pad] f32
    if s_pad != s_actual:            # static: mask padded context positions
        col = jax.lax.broadcasted_iota(jnp.int32, scores.shape, 2)
        scores = jnp.where(col < s_actual, scores, -1e30)
    m = jnp.max(scores, axis=-1, keepdims=True)
    p = jnp.exp(scores - m)
    l = jnp.sum(p, axis=-1, keepdims=True)
    inv = pl.reciprocal(l, approx=True)                              # [Bb, tq, 1]
    out = jnp.einsum("bqk,bkd->bqd", p.astype(jnp.bfloat16), v,
                     preferred_element_type=jnp.float32)             # [Bb, tq, Do] f32
    out_ref[...] = (out * inv).astype(out_ref.dtype)


# --- Path A: fully fused (K/V projection hoisted into VMEM scratch per batch block). ---
def _fused_kernel(tokens_ref, context_ref, wq_ref, wk_ref, wv_ref,
                  out_ref, k_scratch, v_scratch, *, s_actual):
    qt = pl.program_id(1)
    bb, s_pad, dc = context_ref.shape
    e = wk_ref.shape[1]
    do = wv_ref.shape[1]

    # K / V projection once per batch block (first query tile only), as one fat
    # (Bb*S_pad, Dc) matmul so every MXU push carries the full batch block.
    @pl.when(qt == 0)
    def _():
        ctx2d = context_ref[...].reshape(bb * s_pad, dc)             # bf16
        k = jnp.dot(ctx2d, wk_ref[...], preferred_element_type=jnp.float32)
        v = jnp.dot(ctx2d, wv_ref[...], preferred_element_type=jnp.float32)
        k_scratch[...] = k.astype(jnp.bfloat16).reshape(bb, s_pad, e)
        v_scratch[...] = v.astype(jnp.bfloat16).reshape(bb, s_pad, do)

    bb_t, tq, dh = tokens_ref.shape
    tok2d = tokens_ref[...].reshape(bb_t * tq, dh)
    # 1/sqrt(embed_dim) is pre-folded into Wq in the wrapper.
    q = jnp.dot(tok2d, wq_ref[...], preferred_element_type=jnp.float32)
    q = q.astype(jnp.bfloat16).reshape(bb_t, tq, e)

    _attention_core(q, k_scratch[...], v_scratch[...], out_ref,
                    s_actual=s_actual, s_pad=s_pad)


# --- Path B: K/V precomputed in the wrapper (wide context_dim); pure attention kernel. ---
def _precomputed_kv_kernel(tokens_ref, k_ref, v_ref, wq_ref, out_ref, *, s_actual):
    bb, tq, dh = tokens_ref.shape
    s_pad = k_ref.shape[1]
    e = wq_ref.shape[1]
    tok2d = tokens_ref[...].reshape(bb * tq, dh)
    q = jnp.dot(tok2d, wq_ref[...], preferred_element_type=jnp.float32)
    q = q.astype(jnp.bfloat16).reshape(bb, tq, e)
    _attention_core(q, k_ref[...], v_ref[...], out_ref,
                    s_actual=s_actual, s_pad=s_pad)


def _vmem_limit_bytes():
    """Derive the scoped VMEM limit from the actual chip (v7x: 64 MiB, v5e/v6e: 128 MiB)."""
    cap = None
    try:
        cap = getattr(pltpu.get_tpu_info(), "vmem_capacity_bytes", None)
    except Exception:
        cap = None
    if not cap:
        cap = 64 * 1024 * 1024                 # conservative (v7x-sized) fallback
    return int(min(cap * 3 // 4, 100 * 1024 * 1024))


def _choose_block_sizes(B, T, s_pad, dh, dc, e, do, *, q_tile, budget, fused):
    """Pick (Bb, tq, n_q_tiles): equalized query tiles, biggest batch block within budget."""
    bf = 2  # bf16 bytes

    def estimate(bb, tq):
        if fused:
            blocks = 2 * bb * (tq * dh + s_pad * dc + tq * do) * bf      # double-buffered I/O
            blocks += 2 * (dh * e + dc * e + dc * do) * bf               # resident weights
            scratch = bb * s_pad * (e + do) * bf                         # K/V VMEM scratch
        else:
            blocks = 2 * bb * (tq * dh + s_pad * (e + do) + tq * do) * bf
            blocks += 2 * dh * e * bf
            scratch = 0
        temps = bb * tq * (2 * 4 * s_pad + bf * s_pad + 2 * 4 * max(e, do))  # scores/p/out
        return blocks + scratch + temps

    cands = []
    t = max(_round_up(q_tile, 8), 8)
    while True:
        cands.append(t)
        if t <= 8:
            break
        t = max(8, t // 2)

    for qt in cands:
        n_tiles = max(1, _cdiv(T, qt))
        tq = _round_up(_cdiv(T, n_tiles), 8)    # equalized tiles: no 2x last-tile waste
        for bb in range(min(B, 8), 0, -1):
            if B % bb:
                continue
            if estimate(bb, tq) <= budget:
                return bb, tq, n_tiles
    return 1, 8, max(1, _cdiv(T, 8))


def cross_attention(tokens, wq, wk, wv, context=None, *, q_tile=256):
    """Fused CrossAttention forward pass (single head, as in the PyTorch module)."""
    if context is None:                  # self-attention branch of the PyTorch module
        context = tokens
    B, T, Dh = tokens.shape
    Bc, S, Dc = context.shape
    assert Bc == B
    E = wq.shape[1]
    assert wq.shape == (Dh, E) and wk.shape == (Dc, E) and wv.shape[0] == Dc
    Do = wv.shape[1]

    s_pad = _round_up(S, 128)            # lane-dense scores / MXU N dim
    vmem_limit = _vmem_limit_bytes()
    budget = int(vmem_limit * 0.8)

    # Wide context (SD text encoder: Dc >> E+Do): project K/V once in the wrapper at full
    # MXU utilization; the kernel is then a pure attention kernel and both grid axes are
    # megacore-parallel. Otherwise keep the K/V projection fused per batch block.
    precompute_kv = Dc >= 2 * (E + Do)

    Bb, tq, n_q = _choose_block_sizes(B, T, s_pad, Dh, Dc, E, Do,
                                      q_tile=q_tile, budget=budget,
                                      fused=not precompute_kv)
    t_pad = tq * n_q
    grid = (B // Bb, n_q)

    scale = 1.0 / math.sqrt(E)
    tokens_p = jnp.pad(tokens, ((0, 0), (0, t_pad - T), (0, 0))).astype(jnp.bfloat16)
    wq_b = (wq * scale).astype(jnp.bfloat16)     # fold 1/sqrt(E) into Wq (one-time, weight-sized)

    out_shape = jax.ShapeDtypeStruct((B, t_pad, Do), jnp.bfloat16)   # bf16 writeback
    tok_spec = pl.BlockSpec((Bb, tq, Dh), lambda b, q: (b, q, 0))
    out_spec = pl.BlockSpec((Bb, tq, Do), lambda b, q: (b, q, 0))
    wq_spec = pl.BlockSpec((Dh, E), lambda b, q: (0, 0))             # resident weight

    if precompute_kv:
        ctx_b = context.astype(jnp.bfloat16)
        k = jnp.einsum("bsd,de->bse", ctx_b, wk.astype(jnp.bfloat16),
                       preferred_element_type=jnp.float32).astype(jnp.bfloat16)
        v = jnp.einsum("bsd,dh->bsh", ctx_b, wv.astype(jnp.bfloat16),
                       preferred_element_type=jnp.float32).astype(jnp.bfloat16)
        k = jnp.pad(k, ((0, 0), (0, s_pad - S), (0, 0)))
        v = jnp.pad(v, ((0, 0), (0, s_pad - S), (0, 0)))

        kernel = functools.partial(_precomputed_kv_kernel, s_actual=S)
        out = pl.pallas_call(
            kernel,
            out_shape=out_shape,
            grid_spec=pltpu.PrefetchScalarGridSpec(
                num_scalar_prefetch=0,
                grid=grid,
                in_specs=[
                    tok_spec,
                    pl.BlockSpec((Bb, s_pad, E), lambda b, q: (b, 0, 0)),
                    pl.BlockSpec((Bb, s_pad, Do), lambda b, q: (b, 0, 0)),
                    wq_spec,
                ],
                out_specs=out_spec,
            ),
            compiler_params=pltpu.CompilerParams(
                dimension_semantics=("parallel", "parallel"),
                vmem_limit_bytes=vmem_limit,
            ),
        )(tokens_p, k, v, wq_b)
    else:
        context_p = jnp.pad(context, ((0, 0), (0, s_pad - S), (0, 0))).astype(jnp.bfloat16)
        kernel = functools.partial(_fused_kernel, s_actual=S)
        out = pl.pallas_call(
            kernel,
            out_shape=out_shape,
            grid_spec=pltpu.PrefetchScalarGridSpec(
                num_scalar_prefetch=0,
                grid=grid,
                in_specs=[
                    tok_spec,
                    pl.BlockSpec((Bb, s_pad, Dc), lambda b, q: (b, 0, 0)),   # full padded context
                    wq_spec,
                    pl.BlockSpec((Dc, E), lambda b, q: (0, 0)),              # Wk (resident)
                    pl.BlockSpec((Dc, Do), lambda b, q: (0, 0)),             # Wv (resident)
                ],
                out_specs=out_spec,
                scratch_shapes=[
                    pltpu.VMEM((Bb, s_pad, E), jnp.bfloat16),    # K, hoisted per batch block
                    pltpu.VMEM((Bb, s_pad, Do), jnp.bfloat16),   # V, hoisted per batch block
                ],
            ),
            compiler_params=pltpu.CompilerParams(
                dimension_semantics=("parallel", "arbitrary"),
                vmem_limit_bytes=vmem_limit,
            ),
        )(tokens_p, context_p, wq_b, wk, wv)
        # TODO(synk): Do < 128 still forces masked vst; packing the stored last dim to a
        # multiple of 128 lanes (layout plumbing) is left out to keep the kernel general.

    return out[:, :T, :].astype(tokens.dtype)


def _reference(tokens, wq, wk, wv, context=None):
    if context is None:
        context = tokens
    E = wq.shape[1]
    q = jnp.einsum("btd,de->bte", tokens, wq)
    k = jnp.einsum("bsd,de->bse", context, wk)
    v = jnp.einsum("bsd,dh->bsh", context, wv)
    scores = jnp.einsum("bte,bse->bts", q, k) / math.sqrt(E)
    attn = jax.nn.softmax(scores, axis=-1)
    return jnp.einsum("bts,bsh->bth", attn, v)


if __name__ == "__main__":
    key = jax.random.PRNGKey(0)
    B, T, S = 2, 64, 77                    # S=77 (SD text context) exercises the 77 -> 128 padding
    hidden_dim, embed_dim, context_dim = 64, 32, 48
    wide_context_dim = 512                 # exercises the precomputed-K/V path (Dc >> E + Do)

    keys = jax.random.split(key, 9)
    tokens = jax.random.normal(keys[0], (B, T, hidden_dim), jnp.float32)
    context = jax.random.normal(keys[1], (B, S, context_dim), jnp.float32)
    wq = jax.random.normal(keys[2], (hidden_dim, embed_dim), jnp.float32) / math.sqrt(hidden_dim)
    wk = jax.random.normal(keys[3], (context_dim, embed_dim), jnp.float32) / math.sqrt(context_dim)
    wv = jax.random.normal(keys[4], (context_dim, hidden_dim), jnp.float32) / math.sqrt(context_dim)
    # self-attention branch weights (context_dim is None in the PyTorch module)
    wk_s = jax.random.normal(keys[5], (hidden_dim, embed_dim), jnp.float32) / math.sqrt(hidden_dim)
    wv_s = jax.random.normal(keys[6], (hidden_dim, hidden_dim), jnp.float32) / math.sqrt(hidden_dim)
    # wide-context cross-attention (SD text-encoder style)
    context_w = jax.random.normal(keys[7], (B, S, wide_context_dim), jnp.float32)
    wk_w = jax.random.normal(keys[8], (wide_context_dim, embed_dim), jnp.float32) / math.sqrt(wide_context_dim)
    wv_w = jax.random.normal(jax.random.PRNGKey(1),
                             (wide_context_dim, hidden_dim), jnp.float32) / math.sqrt(wide_context_dim)

    # The kernel feeds the MXU in bf16 (f32 accumulation) and writes bf16; compare against a
    # reference built from the same bf16-quantized inputs so the check isolates kernel math.
    def q32(x):
        return x.astype(jnp.bfloat16).astype(jnp.float32)

    tok_q, ctx_q, ctxw_q = q32(tokens), q32(context), q32(context_w)
    wq_q, wk_q, wv_q = q32(wq), q32(wk), q32(wv)
    wk_sq, wv_sq = q32(wk_s), q32(wv_s)
    wk_wq, wv_wq = q32(wk_w), q32(wv_w)
    tol = 7.5e-2   # bf16 end-to-end (inputs, K/V, P, and output)

    # 1) Cross-attention, fused K/V path (narrow context_dim).
    out = jax.block_until_ready(cross_attention(tokens, wq, wk, wv, context=context))
    ref = _reference(tok_q, wq_q, wk_q, wv_q, context=ctx_q)
    assert out.shape == (B, T, hidden_dim)
    assert bool(jnp.isfinite(out).all())
    err = float(jnp.max(jnp.abs(out - ref)))
    assert err < tol, f"cross-attention max abs error {err}"

    # 2) Self-attention (context=None branch of the PyTorch forward).
    out_s = jax.block_until_ready(cross_attention(tokens, wq, wk_s, wv_s, context=None))
    ref_s = _reference(tok_q, wq_q, wk_sq, wv_sq, context=None)
    assert bool(jnp.isfinite(out_s).all())
    err_s = float(jnp.max(jnp.abs(out_s - ref_s)))
    assert err_s < tol, f"self-attention max abs error {err_s}"

    # 3) Cross-attention with a wide context (precomputed-K/V path).
    out_w = jax.block_until_ready(cross_attention(tokens, wq, wk_w, wv_w, context=context_w))
    ref_w = _reference(tok_q, wq_q, wk_wq, wv_wq, context=ctxw_q)
    assert bool(jnp.isfinite(out_w).all())
    err_w = float(jnp.max(jnp.abs(out_w - ref_w)))
    assert err_w < tol, f"wide-context cross-attention max abs error {err_w}"

    print("KERNEL_OK")
</pallas_src>

<mosaic_0001>
module attributes {stable_mosaic.version = 11 : i64} {
  func.func @_fused_kernel(%arg0: i32, %arg1: i32, %arg2: memref<2x64x64xbf16, #tpu.memory_space<vmem>>, %arg3: memref<2x128x48xbf16, #tpu.memory_space<vmem>>, %arg4: memref<64x32xbf16, #tpu.memory_space<vmem>>, %arg5: memref<48x32xf32, #tpu.memory_space<vmem>>, %arg6: memref<48x64xf32, #tpu.memory_space<vmem>>, %arg7: memref<2x64x64xbf16, #tpu.memory_space<vmem>>, %arg8: memref<2x128x32xbf16, #tpu.memory_space<vmem>>, %arg9: memref<2x128x64xbf16, #tpu.memory_space<vmem>>) attributes {dimension_semantics = [#tpu.dimension_semantics<parallel>, #tpu.dimension_semantics<arbitrary>], iteration_bounds = array<i64: 1, 1>, scalar_prefetch = 0 : i64, scratch_operands = 2 : i64, tpu.core_type = #tpu.core_type<tc>, window_params = [{transform_indices = @transform_0, window_bounds = array<i64: 2, 64, 64>}, {transform_indices = @transform_1, window_bounds = array<i64: 2, 128, 48>}, {pipeline_mode = #tpu.pipeline_mode<synchronous>, transform_indices = @transform_2, window_bounds = array<i64: 64, 32>}, {pipeline_mode = #tpu.pipeline_mode<synchronous>, transform_indices = @transform_3, window_bounds = array<i64: 48, 32>}, {pipeline_mode = #tpu.pipeline_mode<synchronous>, transform_indices = @transform_4, window_bounds = array<i64: 48, 64>}, {transform_indices = @transform_5, window_bounds = array<i64: 2, 64, 64>}]} {
    %c0_i32 = arith.constant 0 : i32
    %0 = arith.cmpi eq, %arg1, %c0_i32 : i32
    %1 = arith.extui %0 : i1 to i32
    %c0_i32_0 = arith.constant 0 : i32
    %2 = arith.cmpi ne, %1, %c0_i32_0 : i32
    scf.if %2 {
      %c0_19 = arith.constant 0 : index
      %c0_20 = arith.constant 0 : index
      %c0_21 = arith.constant 0 : index
      %31 = vector.load %arg3[%c0_19, %c0_20, %c0_21] : memref<2x128x48xbf16, #tpu.memory_space<vmem>>, vector<2x128x48xbf16>
      %32 = vector.shape_cast %31 : vector<2x128x48xbf16> to vector<256x48xbf16>
      %c0_22 = arith.constant 0 : index
      %c0_23 = arith.constant 0 : index
      %33 = vector.load %arg5[%c0_22, %c0_23] : memref<48x32xf32, #tpu.memory_space<vmem>>, vector<48x32xf32>
      %cst_24 = arith.constant dense<0.000000e+00> : vector<256x32xf32>
      %34 = tpu.matmul %32, %33, %cst_24 {dimension_numbers = #tpu.dot_dimension_numbers<[1], [0], [0], [1], [0, 0, 1, 1], [], []>} : vector<256x48xbf16>, vector<48x32xf32>, vector<256x32xf32> -> vector<256x32xf32>
      %c0_25 = arith.constant 0 : index
      %c0_26 = arith.constant 0 : index
      %35 = vector.load %arg6[%c0_25, %c0_26] : memref<48x64xf32, #tpu.memory_space<vmem>>, vector<48x64xf32>
      %cst_27 = arith.constant dense<0.000000e+00> : vector<256x64xf32>
      %36 = tpu.matmul %32, %35, %cst_27 {dimension_numbers = #tpu.dot_dimension_numbers<[1], [0], [0], [1], [0, 0, 1, 1], [], []>} : vector<256x48xbf16>, vector<48x64xf32>, vector<256x64xf32> -> vector<256x64xf32>
      %37 = arith.truncf %34 : vector<256x32xf32> to vector<256x32xbf16>
      %38 = vector.shape_cast %37 : vector<256x32xbf16> to vector<2x128x32xbf16>
      %c0_28 = arith.constant 0 : index
      %c0_29 = arith.constant 0 : index
      %c0_30 = arith.constant 0 : index
      %39 = vector.load %arg8[%c0_28, %c0_29, %c0_30] : memref<2x128x32xbf16, #tpu.memory_space<vmem>>, vector<2x128x32xbf16>
      tpu.vector_store %arg8[%c0_28, %c0_29, %c0_30], %38 {strides = array<i32>} : memref<2x128x32xbf16, #tpu.memory_space<vmem>>, vector<2x128x32xbf16>,
      %40 = arith.truncf %36 : vector<256x64xf32> to vector<256x64xbf16>
      %41 = vector.shape_cast %40 : vector<256x64xbf16> to vector<2x128x64xbf16>
      %c0_31 = arith.constant 0 : index
      %c0_32 = arith.constant 0 : index
      %c0_33 = arith.constant 0 : index
      %42 = vector.load %arg9[%c0_31, %c0_32, %c0_33] : memref<2x128x64xbf16, #tpu.memory_space<vmem>>, vector<2x128x64xbf16>
      tpu.vector_store %arg9[%c0_31, %c0_32, %c0_33], %41 {strides = array<i32>} : memref<2x128x64xbf16, #tpu.memory_space<vmem>>, vector<2x128x64xbf16>,
    } else {
    }
    %c0 = arith.constant 0 : index
    %c0_1 = arith.constant 0 : index
    %c0_2 = arith.constant 0 : index
    %3 = vector.load %arg2[%c0, %c0_1, %c0_2] : memref<2x64x64xbf16, #tpu.memory_space<vmem>>, vector<2x64x64xbf16>
    %4 = vector.shape_cast %3 : vector<2x64x64xbf16> to vector<128x64xbf16>
    %c0_3 = arith.constant 0 : index
    %c0_4 = arith.constant 0 : index
    %5 = vector.load %arg4[%c0_3, %c0_4] : memref<64x32xbf16, #tpu.memory_space<vmem>>, vector<64x32xbf16>
    %cst = arith.constant dense<0.000000e+00> : vector<128x32xf32>
    %6 = tpu.matmul %4, %5, %cst {dimension_numbers = #tpu.dot_dimension_numbers<[1], [0], [0], [1], [0, 0, 1, 1], [], []>} : vector<128x64xbf16>, vector<64x32xbf16>, vector<128x32xf32> -> vector<128x32xf32>
    %7 = arith.truncf %6 : vector<128x32xf32> to vector<128x32xbf16>
    %8 = vector.shape_cast %7 : vector<128x32xbf16> to vector<2x64x32xbf16>
    %c0_5 = arith.constant 0 : index
    %c0_6 = arith.constant 0 : index
    %c0_7 = arith.constant 0 : index
    %9 = vector.load %arg8[%c0_5, %c0_6, %c0_7] : memref<2x128x32xbf16, #tpu.memory_space<vmem>>, vector<2x128x32xbf16>
    %c0_8 = arith.constant 0 : index
    %c0_9 = arith.constant 0 : index
    %c0_10 = arith.constant 0 : index
    %10 = vector.load %arg9[%c0_8, %c0_9, %c0_10] : memref<2x128x64xbf16, #tpu.memory_space<vmem>>, vector<2x128x64xbf16>
    "tpu.trace_start"() <{level = 10 : i32, message = "bqe,bke->bqk"}> : () -> ()
    %cst_11 = arith.constant dense<0.000000e+00> : vector<2x64x128xf32>
    %11 = tpu.matmul %8, %9, %cst_11 {dimension_numbers = #tpu.dot_dimension_numbers<[2], [2], [1], [1], [0, 0, 0, 1, 1, 1], [0], [0]>} : vector<2x64x32xbf16>, vector<2x128x32xbf16>, vector<2x64x128xf32> -> vector<2x64x128xf32>
    "tpu.trace_stop"() : () -> ()
    %12 = tpu.iota {dimensions = array<i32: 2>} : vector<2x64x128xi32>
    %c77_i32 = arith.constant 77 : i32
    %13 = vector.broadcast %c77_i32 : i32 to vector<2x64x128xi32>
    %14 = arith.cmpi slt, %12, %13 : vector<2x64x128xi32>
    %cst_12 = arith.constant -1.000000e+30 : f32
    %15 = vector.broadcast %cst_12 : f32 to vector<2x64x128xf32>
    %16 = arith.select %14, %11, %15 : vector<2x64x128xi1>, vector<2x64x128xf32>
    %cst_13 = arith.constant dense<0xFF800000> : vector<2x64xf32>
    %17 = vector.multi_reduction <maximumf>, %16, %cst_13 [2] : vector<2x64x128xf32> to vector<2x64xf32>
    %18 = vector.shape_cast %17 : vector<2x64xf32> to vector<2x64x1xf32>
    %19 = vector.broadcast %18 : vector<2x64x1xf32> to vector<2x64x128xf32>
    %20 = arith.subf %16, %19 : vector<2x64x128xf32>
    %21 = math.exp %20 : vector<2x64x128xf32>
    %cst_14 = arith.constant dense<0.000000e+00> : vector<2x64xf32>
    %22 = vector.multi_reduction <add>, %21, %cst_14 [2] : vector<2x64x128xf32> to vector<2x64xf32>
    %23 = vector.shape_cast %22 : vector<2x64xf32> to vector<2x64x1xf32>
    %24 = tpu.reciprocal %23 {approx = true} : vector<2x64x1xf32> -> vector<2x64x1xf32>
    %25 = arith.truncf %21 : vector<2x64x128xf32> to vector<2x64x128xbf16>
    "tpu.trace_start"() <{level = 10 : i32, message = "bqk,bkd->bqd"}> : () -> ()
    %cst_15 = arith.constant dense<0.000000e+00> : vector<2x64x64xf32>
    %26 = tpu.matmul %25, %10, %cst_15 {dimension_numbers = #tpu.dot_dimension_numbers<[2], [1], [1], [2], [0, 0, 0, 1, 1, 2], [0], [0]>} : vector<2x64x128xbf16>, vector<2x128x64xbf16>, vector<2x64x64xf32> -> vector<2x64x64xf32>
    "tpu.trace_stop"() : () -> ()
    %27 = vector.broadcast %24 : vector<2x64x1xf32> to vector<2x64x64xf32>
    %28 = arith.mulf %26, %27 : vector<2x64x64xf32>
    %29 = arith.truncf %28 : vector<2x64x64xf32> to vector<2x64x64xbf16>
    %c0_16 = arith.constant 0 : index
    %c0_17 = arith.constant 0 : index
    %c0_18 = arith.constant 0 : index
    %30 = vector.load %arg7[%c0_16, %c0_17, %c0_18] : memref<2x64x64xbf16, #tpu.memory_space<vmem>>, vector<2x64x64xbf16>
    tpu.vector_store %arg7[%c0_16, %c0_17, %c0_18], %29 {strides = array<i32>} : memref<2x64x64xbf16, #tpu.memory_space<vmem>>, vector<2x64x64xbf16>,
    return
  }
  func.func @transform_0(%arg0: i32, %arg1: i32) -> (i32, i32, i32) {
    %c0_i32 = arith.constant 0 : i32
    %c0_i32_0 = arith.constant 0 : i32
    return %arg0, %arg1, %c0_i32 : i32, i32, i32
  }
  func.func @transform_1(%arg0: i32, %arg1: i32) -> (i32, i32, i32) {
    %c0_i32 = arith.constant 0 : i32
    %c0_i32_0 = arith.constant 0 : i32
    %c0_i32_1 = arith.constant 0 : i32
    return %arg0, %c0_i32, %c0_i32_0 : i32, i32, i32
  }
  func.func @transform_2(%arg0: i32, %arg1: i32) -> (i32, i32) {
    %c0_i32 = arith.constant 0 : i32
    %c0_i32_0 = arith.constant 0 : i32
    %c0_i32_1 = arith.constant 0 : i32
    return %c0_i32, %c0_i32_0 : i32, i32
  }
  func.func @transform_3(%arg0: i32, %arg1: i32) -> (i32, i32) {
    %c0_i32 = arith.constant 0 : i32
    %c0_i32_0 = arith.constant 0 : i32
    %c0_i32_1 = arith.constant 0 : i32
    return %c0_i32, %c0_i32_0 : i32, i32
  }
  func.func @transform_4(%arg0: i32, %arg1: i32) -> (i32, i32) {
    %c0_i32 = arith.constant 0 : i32
    %c0_i32_0 = arith.constant 0 : i32
    %c0_i32_1 = arith.constant 0 : i32
    return %c0_i32, %c0_i32_0 : i32, i32
  }
  func.func @transform_5(%arg0: i32, %arg1: i32) -> (i32, i32, i32) {
    %c0_i32 = arith.constant 0 : i32
    %c0_i32_0 = arith.constant 0 : i32
    return %arg0, %arg1, %c0_i32 : i32, i32, i32
  }
}

</mosaic_0001>

<llo_original>
// kernel: tpu_custom_call.1
$region0: #{tpu_custom_call.1}
  #allocation0 [shape = 'u32[]', space=smem, size = 0x4, offset = 0x4, fixed_abs, tag = 'smem constant byte address 0x4 - core index']
  #allocation1 [shape = 'u32[144,128]{1,0:T(1,128)}', space=vmem, size = 0x12000, scoped, tag = 'internal scratch']
  #allocation2 [shape = 'bf16[2,128,32]{2,1,0:T(8,128)(2,1)}', space=vmem, size = 0x10000, scoped, tag = 'scratch operand']
  #allocation3 [shape = 'bf16[2,128,64]{2,1,0:T(8,128)(2,1)}', space=vmem, size = 0x10000, scoped, tag = 'scratch operand']
  %s0 = inlined_call_operand.vmem [shape: bf16[2,64,64], index: 0, kind: input, shape index: {}]
  %s1 = inlined_call_operand.vmem [shape: bf16[2,128,48], index: 1, kind: input, shape index: {}]
  %s2 = inlined_call_operand.vmem [shape: bf16[64,32], index: 2, kind: input, shape index: {}]
  %s3 = inlined_call_operand.vmem [shape: f32[48,32], index: 3, kind: input, shape index: {}]
  %s4 = inlined_call_operand.vmem [shape: f32[48,64], index: 4, kind: input, shape index: {}]
  %s5 = inlined_call_operand.hbm [shape: bf16[2,64,64], index: 5, kind: output, shape index: {}]
  %s6 = sld [smem:[#allocation0]]
  $region34: #{tpu_custom_call.1} parent=0
    _
  %s8 = ssub.s32 1, %s6
  %s9 = scalar_select 0, %s8, %s6
  $region1: #{tpu_custom_call.1} parent=0
    #allocation4 [shape = 'u8[32768]{0}', space=vmem, size = 0x8000, scoped, tag = 'output window, operand 0, single buffered']
    #allocation5 [shape = 's32[1]{0}', space=sflag, size = 0x4, scoped, tag = 'scoped memory for tpu_custom_call.1']
    %10 = vsyncpa [#allocation5], 0
    // Predicated region
    $region2: #{tpu_custom_call.1} parent=1 // pred_check
      _
    $region3: #{tpu_custom_call.1} parent=1 // pred_check_branch
      %12 = sbr.rel (0) target = $region5
    $region4: #{tpu_custom_call.1} parent=1 // pred_region
      _
    $region5: #{tpu_custom_call.1} parent=1 // pred_fallthru
      _
    // Predicated region
    $region6: #{tpu_custom_call.1} parent=1 // pred_check
      _
    $region7: #{tpu_custom_call.1} parent=1 // pred_check_branch
      %14 = sbr.rel (0) target = $region9
    $region8: #{tpu_custom_call.1} parent=1 // pred_region
      _
    $region9: #{tpu_custom_call.1} parent=1 // pred_fallthru
      _
    // Predicated region
    $region10: #{tpu_custom_call.1} parent=1 // pred_check
      _
    $region11: #{tpu_custom_call.1} parent=1 // pred_check_branch
      %16 = sbr.rel (0) target = $region13
    $region12: #{tpu_custom_call.1} parent=1 // pred_region
      _
    $region13: #{tpu_custom_call.1} parent=1 // pred_fallthru
      _
    // Predicated region
    $region14: #{tpu_custom_call.1} parent=1 // pred_check
      _
    $region15: #{tpu_custom_call.1} parent=1 // pred_check_branch
      %18 = sbr.rel (0) target = $region17
    $region16: #{tpu_custom_call.1} parent=1 // pred_region
      _
    $region17: #{tpu_custom_call.1} parent=1 // pred_fallthru
      _
    // Predicated region
    $region18: #{tpu_custom_call.1} parent=1 // pred_check
      _
    $region19: #{tpu_custom_call.1} parent=1 // pred_check_branch
      %20 = sbr.rel (0) target = $region21
    $region20: #{tpu_custom_call.1} parent=1 // pred_region
      _
    $region21: #{tpu_custom_call.1} parent=1 // pred_fallthru
      _
    %p22 = scmp.eq.s32.totalorder 0, 0
    // Predicated region
    $region22: #{tpu_custom_call.1} parent=1 // pred_check
      %p23 = pneg %p22
    $region23: #{tpu_custom_call.1} parent=1 // pred_check_branch
      %25 = sbr.rel (%p23) target = $region25
    $region24: #{tpu_custom_call.1} parent=1 // pred_region
      %v26 = vld [vmem:[%s1] sm:$0xf]
      %v27 = vld [vmem:[%s1 + $0x4] sm:$0xf]
      %v28 = vld [vmem:[%s1 + $0x8] sm:$0xf]
      %v29 = vld [vmem:[%s1 + $0xc] sm:$0xf]
      %v30 = vld [vmem:[%s1 + $0x10] sm:$0xf]
      %v31 = vld [vmem:[%s1 + $0x14] sm:$0xf]
      %v32 = vld [vmem:[%s1 + $0x18] sm:$0xf]
      %v33 = vld [vmem:[%s1 + $0x1c] sm:$0xf]
      %v34 = vld [vmem:[%s1 + $0x20] sm:$0xf]
      %v35 = vld [vmem:[%s1 + $0x24] sm:$0xf]
      %v36 = vld [vmem:[%s1 + $0x28] sm:$0xf]
      %v37 = vld [vmem:[%s1 + $0x2c] sm:$0xf]
      %v38 = vld [vmem:[%s1 + $0x30] sm:$0xf]
      %v39 = vld [vmem:[%s1 + $0x34] sm:$0xf]
      %v40 = vld [vmem:[%s1 + $0x38] sm:$0xf]
      %v41 = vld [vmem:[%s1 + $0x3c] sm:$0xf]
      %v42 = vld [vmem:[%s1 + $0x40] sm:$0xf]
      %v43 = vld [vmem:[%s1 + $0x44] sm:$0xf]
      %v44 = vld [vmem:[%s1 + $0x48] sm:$0xf]
      %v45 = vld [vmem:[%s1 + $0x4c] sm:$0xf]
      %v46 = vld [vmem:[%s1 + $0x50] sm:$0xf]
      %v47 = vld [vmem:[%s1 + $0x54] sm:$0xf]
      %v48 = vld [vmem:[%s1 + $0x58] sm:$0xf]
      %v49 = vld [vmem:[%s1 + $0x5c] sm:$0xf]
      %v50 = vld [vmem:[%s1 + $0x60] sm:$0xf]
      %v51 = vld [vmem:[%s1 + $0x64] sm:$0xf]
      %v52 = vld [vmem:[%s1 + $0x68] sm:$0xf]
      %v53 = vld [vmem:[%s1 + $0x6c] sm:$0xf]
      %v54 = vld [vmem:[%s1 + $0x70] sm:$0xf]
      %v55 = vld [vmem:[%s1 + $0x74] sm:$0xf]
      %v56 = vld [vmem:[%s1 + $0x78] sm:$0xf]
      %v57 = vld [vmem:[%s1 + $0x7c] sm:$0xf]
      %v58 = vld [vmem:[%s3] sm:$0xff]
      %v59 = vld [vmem:[%s3 + $0x8] sm:$0xff]
      %v60 = vld [vmem:[%s3 + $0x10] sm:$0xff]
      %v61 = vld [vmem:[%s3 + $0x18] sm:$0xff]
      %v62 = vld [vmem:[%s3 + $0x20] sm:$0xff]
      %v63 = vld [vmem:[%s3 + $0x28] sm:$0xff]
      %v96 = vunpack.c.l.b16 %v26
      %v97 = vunpack.c.l.b16 %v27
      %v98 = vunpack.c.l.b16 %v28
      %v99 = vunpack.c.l.b16 %v29
      %v100 = vunpack.c.l.b16 %v30
      %v101 = vunpack.c.l.b16 %v31
      %v102 = vunpack.c.l.b16 %v32
      %v103 = vunpack.c.l.b16 %v33
      %v104 = vunpack.c.l.b16 %v34
      %v105 = vunpack.c.l.b16 %v35
      %v106 = vunpack.c.l.b16 %v36
      %v107 = vunpack.c.l.b16 %v37
      %v108 = vunpack.c.l.b16 %v38
      %v109 = vunpack.c.l.b16 %v39
      %v110 = vunpack.c.l.b16 %v40
      %v111 = vunpack.c.l.b16 %v41
      %v112 = vunpack.c.l.b16 %v42
      %v113 = vunpack.c.l.b16 %v43
      %v114 = vunpack.c.l.b16 %v44
      %v115 = vunpack.c.l.b16 %v45
      %v116 = vunpack.c.l.b16 %v46
      %v117 = vunpack.c.l.b16 %v47
      %v118 = vunpack.c.l.b16 %v48
      %v119 = vunpack.c.l.b16 %v49
      %v120 = vunpack.c.l.b16 %v50
      %v121 = vunpack.c.l.b16 %v51
      %v122 = vunpack.c.l.b16 %v52
      %v123 = vunpack.c.l.b16 %v53
      %v124 = vunpack.c.l.b16 %v54
      %v125 = vunpack.c.l.b16 %v55
      %v126 = vunpack.c.l.b16 %v56
      %v127 = vunpack.c.l.b16 %v57
      %v128 = vpack.c.b16 %v97, %v96
      %v129 = vpack.c.b16 %v99, %v98
      %v130 = vpack.c.b16 %v101, %v100
      %v131 = vpack.c.b16 %v103, %v102
      %v132 = vpack.c.b16 %v105, %v104
      %v133 = vpack.c.b16 %v107, %v106
      %v134 = vpack.c.b16 %v109, %v108
      %v135 = vpack.c.b16 %v111, %v110
      %v136 = vpack.c.b16 %v113, %v112
      %v137 = vpack.c.b16 %v115, %v114
      %v138 = vpack.c.b16 %v117, %v116
      %v139 = vpack.c.b16 %v119, %v118
      %v140 = vpack.c.b16 %v121, %v120
      %v141 = vpack.c.b16 %v123, %v122
      %v142 = vpack.c.b16 %v125, %v124
      %v143 = vpack.c.b16 %v127, %v126
      %vm144 = vcmask 392192
      %v146 = vsel %vm144, %v128, 0
      %v149 = vsel %vm144, %v129, 0
      %v152 = vsel %vm144, %v130, 0
      %v155 = vsel %vm144, %v131, 0
      %v158 = vsel %vm144, %v132, 0
      %v161 = vsel %vm144, %v133, 0
      %v164 = vsel %vm144, %v134, 0
      %v167 = vsel %vm144, %v135, 0
      %v170 = vsel %vm144, %v136, 0
      %v173 = vsel %vm144, %v137, 0
      %v176 = vsel %vm144, %v138, 0
      %v179 = vsel %vm144, %v139, 0
      %v182 = vsel %vm144, %v140, 0
      %v185 = vsel %vm144, %v141, 0
      %v188 = vsel %vm144, %v142, 0
      %v191 = vsel %vm144, %v143, 0
      %193 = vmatprep.subr.mxu0 0.0
      %194 = vmatpush1.msra.mxu0 0.0
      %195 = vmatprep.subr.mxu0 0.0
      %196 = vmatpush1.msra.mxu0 0.0
      %197 = vmatprep.subr.mxu0 0.0
      %198 = vmatpush1.msra.mxu0 0.0
      %199 = vmatprep.subr.mxu0 0.0
      %200 = vmatpush1.msra.mxu0 0.0
      %201 = vmatprep.subr.mxu0 0.0
      %202 = vmatpush1.msra.mxu0 0.0
      %203 = vmatprep.subr.mxu0 0.0
      %204 = vmatpush1.msra.mxu0 0.0
      %205 = vmatprep.subr.mxu0 0.0
      %206 = vmatpush1.msra.mxu0 0.0
      %207 = vmatprep.subr.mxu0 0.0
      %208 = vmatpush1.msra.mxu0 0.0
      %209 = vmatprep.subr.mxu0 0.0
      %210 = vmatpush1.msra.mxu0 0.0
      %211 = vmatprep.subr.mxu0 0.0
      %212 = vmatpush1.msra.mxu0 0.0
      %213 = vmatprep.subr.mxu0 0.0
      %214 = vmatpush1.msra.mxu0 %v63
      %215 = vmatprep.subr.mxu0 0.0
      %216 = vmatpush1.msra.mxu0 %v62
      %217 = vmatprep.subr.mxu0 0.0
      %218 = vmatpush1.msra.mxu0 %v61
      %219 = vmatprep.subr.mxu0 0.0
      %220 = vmatpush1.msra.mxu0 %v60
      %221 = vmatprep.subr.mxu0 0.0
      %222 = vmatpush1.msra.mxu0 %v59
      %223 = vmatprep.subr.mxu0 0.0
      %224 = vmatpush1.msra.mxu0 %v58
      %225 = vmatprep.subr.mxu0 0.0
      %226 = vmatpush2.msra.mxu0 0.0
      %227 = vmatprep.subr.mxu0 0.0
      %228 = vmatpush2.msra.mxu0 0.0
      %229 = vmatprep.subr.mxu0 0.0
      %230 = vmatpush2.msra.mxu0 0.0
      %231 = vmatprep.subr.mxu0 0.0
      %232 = vmatpush2.msra.mxu0 0.0
      %233 = vmatprep.subr.mxu0 0.0
      %234 = vmatpush2.msra.mxu0 0.0
      %235 = vmatprep.subr.mxu0 0.0
      %236 = vmatpush2.msra.mxu0 0.0
      %237 = vmatprep.subr.mxu0 0.0
      %238 = vmatpush2.msra.mxu0 0.0
      %239 = vmatprep.subr.mxu0 0.0
      %240 = vmatpush2.msra.mxu0 0.0
      %241 = vmatprep.subr.mxu0 0.0
      %242 = vmatpush2.msra.mxu0 0.0
      %243 = vmatprep.subr.mxu0 0.0
      %244 = vmatpush2.msra.mxu0 0.0
      %245 = vmatprep.subr.mxu0 0.0
      %246 = vmatpush2.msra.mxu0 0.0
      %247 = vmatprep.subr.mxu0 0.0
      %248 = vmatpush2.msra.mxu0 0.0
      %249 = vmatprep.subr.mxu0 0.0
      %250 = vmatpush2.msra.mxu0 0.0
      %251 = vmatprep.subr.mxu0 0.0
      %252 = vmatpush2.msra.mxu0 0.0
      %253 = vmatprep.subr.mxu0 0.0
      %254 = vmatpush2.msra.mxu0 0.0
      %255 = vmatprep.subr.mxu0 0.0
      %256 = vmatpush2.msra.mxu0 0.0
      %257 = vmatprep.mubr.bf16.mxu0 0
      %258 = vmatmul.mubr.bf16.gmra.mxu0 %v146
      %v259 = vpop.f32.mrf.mxu0
      %v260 = vadd.f32 0.0, %v259
      %v261 = vpop.f32.mrf.mxu0
      %v262 = vpop.f32.mrf.mxu0
      %v263 = vadd.f32 0.0, %v262
      %v264 = vpop.f32.mrf.mxu0
      %265 = vmatprep.mubr.bf16.mxu0 0
      %266 = vmatmul.mubr.bf16.gmra.mxu0 %v149
      %v267 = vpop.f32.mrf.mxu0
      %v268 = vadd.f32 0.0, %v267
      %v269 = vpop.f32.mrf.mxu0
      %v270 = vpop.f32.mrf.mxu0
      %v271 = vadd.f32 0.0, %v270
      %v272 = vpop.f32.mrf.mxu0
      %273 = vmatprep.mubr.bf16.mxu0 0
      %274 = vmatmul.mubr.bf16.gmra.mxu0 %v152
      %v275 = vpop.f32.mrf.mxu0
      %v276 = vadd.f32 0.0, %v275
      %v277 = vpop.f32.mrf.mxu0
      %v278 = vpop.f32.mrf.mxu0
      %v279 = vadd.f32 0.0, %v278
      %v280 = vpop.f32.mrf.mxu0
      %281 = vmatprep.mubr.bf16.mxu0 0
      %282 = vmatmul.mubr.bf16.gmra.mxu0 %v155
      %v283 = vpop.f32.mrf.mxu0
      %v284 = vadd.f32 0.0, %v283
      %v285 = vpop.f32.mrf.mxu0
      %v286 = vpop.f32.mrf.mxu0
      %v287 = vadd.f32 0.0, %v286
      %v288 = vpop.f32.mrf.mxu0
      %289 = vmatprep.mubr.bf16.mxu0 0
      %290 = vmatmul.mubr.bf16.gmra.mxu0 %v158
      %v291 = vpop.f32.mrf.mxu0
      %v292 = vadd.f32 0.0, %v291
      %v293 = vpop.f32.mrf.mxu0
      %v294 = vpop.f32.mrf.mxu0
      %v295 = vadd.f32 0.0, %v294
      %v296 = vpop.f32.mrf.mxu0
      %297 = vmatprep.mubr.bf16.mxu0 0
      %298 = vmatmul.mubr.bf16.gmra.mxu0 %v161
      %v299 = vpop.f32.mrf.mxu0
      %v300 = vadd.f32 0.0, %v299
      %v301 = vpop.f32.mrf.mxu0
      %v302 = vpop.f32.mrf.mxu0
      %v303 = vadd.f32 0.0, %v302
      %v304 = vpop.f32.mrf.mxu0
      %305 = vmatprep.mubr.bf16.mxu0 0
      %306 = vmatmul.mubr.bf16.gmra.mxu0 %v164
      %v307 = vpop.f32.mrf.mxu0
      %v308 = vadd.f32 0.0, %v307
      %v309 = vpop.f32.mrf.mxu0
      %v310 = vpop.f32.mrf.mxu0
      %v311 = vadd.f32 0.0, %v310
      %v312 = vpop.f32.mrf.mxu0
      %313 = vmatprep.mubr.bf16.mxu0 0
      %314 = vmatmul.mubr.bf16.gmra.mxu0 %v167
      %v315 = vpop.f32.mrf.mxu0
      %v316 = vadd.f32 0.0, %v315
      %v317 = vpop.f32.mrf.mxu0
      %v318 = vpop.f32.mrf.mxu0
      %v319 = vadd.f32 0.0, %v318
      %v320 = vpop.f32.mrf.mxu0
      %321 = vmatprep.mubr.bf16.mxu0 0
      %322 = vmatmul.mubr.bf16.gmra.mxu0 %v170
      %v323 = vpop.f32.mrf.mxu0
      %v324 = vadd.f32 0.0, %v323
      %v325 = vpop.f32.mrf.mxu0
      %v326 = vpop.f32.mrf.mxu0
      %v327 = vadd.f32 0.0, %v326
      %v328 = vpop.f32.mrf.mxu0
      %329 = vmatprep.mubr.bf16.mxu0 0
      %330 = vmatmul.mubr.bf16.gmra.mxu0 %v173
      %v331 = vpop.f32.mrf.mxu0
      %v332 = vadd.f32 0.0, %v331
      %v333 = vpop.f32.mrf.mxu0
      %v334 = vpop.f32.mrf.mxu0
      %v335 = vadd.f32 0.0, %v334
      %v336 = vpop.f32.mrf.mxu0
      %337 = vmatprep.mubr.bf16.mxu0 0
      %338 = vmatmul.mubr.bf16.gmra.mxu0 %v176
      %v339 = vpop.f32.mrf.mxu0
      %v340 = vadd.f32 0.0, %v339
      %v341 = vpop.f32.mrf.mxu0
      %v342 = vpop.f32.mrf.mxu0
      %v343 = vadd.f32 0.0, %v342
      %v344 = vpop.f32.mrf.mxu0
      %345 = vmatprep.mubr.bf16.mxu0 0
      %346 = vmatmul.mubr.bf16.gmra.mxu0 %v179
      %v347 = vpop.f32.mrf.mxu0
      %v348 = vadd.f32 0.0, %v347
      %v349 = vpop.f32.mrf.mxu0
      %v350 = vpop.f32.mrf.mxu0
      %v351 = vadd.f32 0.0, %v350
      %v352 = vpop.f32.mrf.mxu0
      %353 = vmatprep.mubr.bf16.mxu0 0
      %354 = vmatmul.mubr.bf16.gmra.mxu0 %v182
      %v355 = vpop.f32.mrf.mxu0
      %v356 = vadd.f32 0.0, %v355
      %v357 = vpop.f32.mrf.mxu0
      %v358 = vpop.f32.mrf.mxu0
      %v359 = vadd.f32 0.0, %v358
      %v360 = vpop.f32.mrf.mxu0
      %361 = vmatprep.mubr.bf16.mxu0 0
      %362 = vmatmul.mubr.bf16.gmra.mxu0 %v185
      %v363 = vpop.f32.mrf.mxu0
      %v364 = vadd.f32 0.0, %v363
      %v365 = vpop.f32.mrf.mxu0
      %v366 = vpop.f32.mrf.mxu0
      %v367 = vadd.f32 0.0, %v366
      %v368 = vpop.f32.mrf.mxu0
      %369 = vmatprep.mubr.bf16.mxu0 0
      %370 = vmatmul.mubr.bf16.gmra.mxu0 %v188
      %v371 = vpop.f32.mrf.mxu0
      %v372 = vadd.f32 0.0, %v371
      %v373 = vpop.f32.mrf.mxu0
      %v374 = vpop.f32.mrf.mxu0
      %v375 = vadd.f32 0.0, %v374
      %v376 = vpop.f32.mrf.mxu0
      %377 = vmatprep.mubr.bf16.mxu0 0
      %378 = vmatmul.mubr.bf16.gmra.mxu0 %v191
      %v379 = vpop.f32.mrf.mxu0
      %v380 = vadd.f32 0.0, %v379
      %v381 = vpop.f32.mrf.mxu0
      %v382 = vpop.f32.mrf.mxu0
      %v383 = vadd.f32 0.0, %v382
      %v384 = vpop.f32.mrf.mxu0
      %385 = vdwg.mxu0
      %v386 = vld [vmem:[%s4] sm:$0xff]
      %v387 = vld [vmem:[%s4 + $0x8] sm:$0xff]
      %v388 = vld [vmem:[%s4 + $0x10] sm:$0xff]
      %v389 = vld [vmem:[%s4 + $0x18] sm:$0xff]
      %v390 = vld [vmem:[%s4 + $0x20] sm:$0xff]
      %v391 = vld [vmem:[%s4 + $0x28] sm:$0xff]
      %392 = vmatprep.subr.mxu0 0.0
      %393 = vmatpush1.msra.mxu0 0.0
      %394 = vmatprep.subr.mxu0 0.0
      %395 = vmatpush1.msra.mxu0 0.0
      %396 = vmatprep.subr.mxu0 0.0
      %397 = vmatpush1.msra.mxu0 0.0
      %398 = vmatprep.subr.mxu0 0.0
      %399 = vmatpush1.msra.mxu0 0.0
      %400 = vmatprep.subr.mxu0 0.0
      %401 = vmatpush1.msra.mxu0 0.0
      %402 = vmatprep.subr.mxu0 0.0
      %403 = vmatpush1.msra.mxu0 0.0
      %404 = vmatprep.subr.mxu0 0.0
      %405 = vmatpush1.msra.mxu0 0.0
      %406 = vmatprep.subr.mxu0 0.0
      %407 = vmatpush1.msra.mxu0 0.0
      %408 = vmatprep.subr.mxu0 0.0
      %409 = vmatpush1.msra.mxu0 0.0
      %410 = vmatprep.subr.mxu0 0.0
      %411 = vmatpush1.msra.mxu0 0.0
      %412 = vmatprep.subr.mxu0 0.0
      %413 = vmatpush1.msra.mxu0 %v391
      %414 = vmatprep.subr.mxu0 0.0
      %415 = vmatpush1.msra.mxu0 %v390
      %416 = vmatprep.subr.mxu0 0.0
      %417 = vmatpush1.msra.mxu0 %v389
      %418 = vmatprep.subr.mxu0 0.0
      %419 = vmatpush1.msra.mxu0 %v388
      %420 = vmatprep.subr.mxu0 0.0
      %421 = vmatpush1.msra.mxu0 %v387
      %422 = vmatprep.subr.mxu0 0.0
      %423 = vmatpush1.msra.mxu0 %v386
      %424 = vmatprep.subr.mxu0 0.0
      %425 = vmatpush2.msra.mxu0 0.0
      %426 = vmatprep.subr.mxu0 0.0
      %427 = vmatpush2.msra.mxu0 0.0
      %428 = vmatprep.subr.mxu0 0.0
      %429 = vmatpush2.msra.mxu0 0.0
      %430 = vmatprep.subr.mxu0 0.0
      %431 = vmatpush2.msra.mxu0 0.0
      %432 = vmatprep.subr.mxu0 0.0
      %433 = vmatpush2.msra.mxu0 0.0
      %434 = vmatprep.subr.mxu0 0.0
      %435 = vmatpush2.msra.mxu0 0.0
      %436 = vmatprep.subr.mxu0 0.0
      %437 = vmatpush2.msra.mxu0 0.0
      %438 = vmatprep.subr.mxu0 0.0
      %439 = vmatpush2.msra.mxu0 0.0
      %440 = vmatprep.subr.mxu0 0.0
      %441 = vmatpush2.msra.mxu0 0.0
      %442 = vmatprep.subr.mxu0 0.0
      %443 = vmatpush2.msra.mxu0 0.0
      %444 = vmatprep.subr.mxu0 0.0
      %445 = vmatpush2.msra.mxu0 0.0
      %446 = vmatprep.subr.mxu0 0.0
      %447 = vmatpush2.msra.mxu0 0.0
      %448 = vmatprep.subr.mxu0 0.0
      %449 = vmatpush2.msra.mxu0 0.0
      %450 = vmatprep.subr.mxu0 0.0
      %451 = vmatpush2.msra.mxu0 0.0
      %452 = vmatprep.subr.mxu0 0.0
      %453 = vmatpush2.msra.mxu0 0.0
      %454 = vmatprep.subr.mxu0 0.0
      %455 = vmatpush2.msra.mxu0 0.0
      %456 = vmatprep.mubr.bf16.mxu0 0
      %457 = vmatmul.mubr.bf16.gmra.mxu0 %v146
      %v458 = vpop.f32.mrf.mxu0
      %v459 = vadd.f32 0.0, %v458
      %v460 = vpop.f32.mrf.mxu0
      %v461 = vpop.f32.mrf.mxu0
      %v462 = vadd.f32 0.0, %v461
      %v463 = vpop.f32.mrf.mxu0
      %464 = vmatprep.mubr.bf16.mxu0 0
      %465 = vmatmul.mubr.bf16.gmra.mxu0 %v149
      %v466 = vpop.f32.mrf.mxu0
      %v467 = vadd.f32 0.0, %v466
      %v468 = vpop.f32.mrf.mxu0
      %v469 = vpop.f32.mrf.mxu0
      %v470 = vadd.f32 0.0, %v469
      %v471 = vpop.f32.mrf.mxu0
      %472 = vmatprep.mubr.bf16.mxu0 0
      %473 = vmatmul.mubr.bf16.gmra.mxu0 %v152
      %v474 = vpop.f32.mrf.mxu0
      %v475 = vadd.f32 0.0, %v474
      %v476 = vpop.f32.mrf.mxu0
      %v477 = vpop.f32.mrf.mxu0
      %v478 = vadd.f32 0.0, %v477
      %v479 = vpop.f32.mrf.mxu0
      %480 = vmatprep.mubr.bf16.mxu0 0
      %481 = vmatmul.mubr.bf16.gmra.mxu0 %v155
      %v482 = vpop.f32.mrf.mxu0
      %v483 = vadd.f32 0.0, %v482
      %v484 = vpop.f32.mrf.mxu0
      %v485 = vpop.f32.mrf.mxu0
      %v486 = vadd.f32 0.0, %v485
      %v487 = vpop.f32.mrf.mxu0
      %488 = vmatprep.mubr.bf16.mxu0 0
      %489 = vmatmul.mubr.bf16.gmra.mxu0 %v158
      %v490 = vpop.f32.mrf.mxu0
      %v491 = vadd.f32 0.0, %v490
      %v492 = vpop.f32.mrf.mxu0
      %v493 = vpop.f32.mrf.mxu0
      %v494 = vadd.f32 0.0, %v493
      %v495 = vpop.f32.mrf.mxu0
      %496 = vmatprep.mubr.bf16.mxu0 0
      %497 = vmatmul.mubr.bf16.gmra.mxu0 %v161
      %v498 = vpop.f32.mrf.mxu0
      %v499 = vadd.f32 0.0, %v498
      %v500 = vpop.f32.mrf.mxu0
      %v501 = vpop.f32.mrf.mxu0
      %v502 = vadd.f32 0.0, %v501
      %v503 = vpop.f32.mrf.mxu0
      %504 = vmatprep.mubr.bf16.mxu0 0
      %505 = vmatmul.mubr.bf16.gmra.mxu0 %v164
      %v506 = vpop.f32.mrf.mxu0
      %v507 = vadd.f32 0.0, %v506
      %v508 = vpop.f32.mrf.mxu0
      %v509 = vpop.f32.mrf.mxu0
      %v510 = vadd.f32 0.0, %v509
      %v511 = vpop.f32.mrf.mxu0
      %512 = vmatprep.mubr.bf16.mxu0 0
      %513 = vmatmul.mubr.bf16.gmra.mxu0 %v167
      %v514 = vpop.f32.mrf.mxu0
      %v515 = vadd.f32 0.0, %v514
      %v516 = vpop.f32.mrf.mxu0
      %v517 = vpop.f32.mrf.mxu0
      %v518 = vadd.f32 0.0, %v517
      %v519 = vpop.f32.mrf.mxu0
      %520 = vmatprep.mubr.bf16.mxu0 0
      %521 = vmatmul.mubr.bf16.gmra.mxu0 %v170
      %v522 = vpop.f32.mrf.mxu0
      %v523 = vadd.f32 0.0, %v522
      %v524 = vpop.f32.mrf.mxu0
      %v525 = vpop.f32.mrf.mxu0
      %v526 = vadd.f32 0.0, %v525
      %v527 = vpop.f32.mrf.mxu0
      %528 = vmatprep.mubr.bf16.mxu0 0
      %529 = vmatmul.mubr.bf16.gmra.mxu0 %v173
      %v530 = vpop.f32.mrf.mxu0
      %v531 = vadd.f32 0.0, %v530
      %v532 = vpop.f32.mrf.mxu0
      %v533 = vpop.f32.mrf.mxu0
      %v534 = vadd.f32 0.0, %v533
      %v535 = vpop.f32.mrf.mxu0
      %536 = vmatprep.mubr.bf16.mxu0 0
      %537 = vmatmul.mubr.bf16.gmra.mxu0 %v176
      %v538 = vpop.f32.mrf.mxu0
      %v539 = vadd.f32 0.0, %v538
      %v540 = vpop.f32.mrf.mxu0
      %v541 = vpop.f32.mrf.mxu0
      %v542 = vadd.f32 0.0, %v541
      %v543 = vpop.f32.mrf.mxu0
      %544 = vmatprep.mubr.bf16.mxu0 0
      %545 = vmatmul.mubr.bf16.gmra.mxu0 %v179
      %v546 = vpop.f32.mrf.mxu0
      %v547 = vadd.f32 0.0, %v546
      %v548 = vpop.f32.mrf.mxu0
      %v549 = vpop.f32.mrf.mxu0
      %v550 = vadd.f32 0.0, %v549
      %v551 = vpop.f32.mrf.mxu0
      %552 = vmatprep.mubr.bf16.mxu0 0
      %553 = vmatmul.mubr.bf16.gmra.mxu0 %v182
      %v554 = vpop.f32.mrf.mxu0
      %v555 = vadd.f32 0.0, %v554
      %v556 = vpop.f32.mrf.mxu0
      %v557 = vpop.f32.mrf.mxu0
      %v558 = vadd.f32 0.0, %v557
      %v559 = vpop.f32.mrf.mxu0
      %560 = vmatprep.mubr.bf16.mxu0 0
      %561 = vmatmul.mubr.bf16.gmra.mxu0 %v185
      %v562 = vpop.f32.mrf.mxu0
      %v563 = vadd.f32 0.0, %v562
      %v564 = vpop.f32.mrf.mxu0
      %v565 = vpop.f32.mrf.mxu0
      %v566 = vadd.f32 0.0, %v565
      %v567 = vpop.f32.mrf.mxu0
      %568 = vmatprep.mubr.bf16.mxu0 0
      %569 = vmatmul.mubr.bf16.gmra.mxu0 %v188
      %v570 = vpop.f32.mrf.mxu0
      %v571 = vadd.f32 0.0, %v570
      %v572 = vpop.f32.mrf.mxu0
      %v573 = vpop.f32.mrf.mxu0
      %v574 = vadd.f32 0.0, %v573
      %v575 = vpop.f32.mrf.mxu0
      %576 = vmatprep.mubr.bf16.mxu0 0
      %577 = vmatmul.mubr.bf16.gmra.mxu0 %v191
      %v578 = vpop.f32.mrf.mxu0
      %v579 = vadd.f32 0.0, %v578
      %v580 = vpop.f32.mrf.mxu0
      %v581 = vpop.f32.mrf.mxu0
      %v582 = vadd.f32 0.0, %v581
      %v583 = vpop.f32.mrf.mxu0
      %584 = vdwg.mxu0
      %v585 = vpack.c.bf16 %v263, %v260
      %v586 = vpack.c.bf16 %v271, %v268
      %v587 = vpack.c.bf16 %v279, %v276
      %v588 = vpack.c.bf16 %v287, %v284
      %v589 = vpack.c.bf16 %v295, %v292
      %v590 = vpack.c.bf16 %v303, %v300
      %v591 = vpack.c.bf16 %v311, %v308
      %v592 = vpack.c.bf16 %v319, %v316
      %v593 = vpack.c.bf16 %v327, %v324
      %v594 = vpack.c.bf16 %v335, %v332
      %v595 = vpack.c.bf16 %v343, %v340
      %v596 = vpack.c.bf16 %v351, %v348
      %v597 = vpack.c.bf16 %v359, %v356
      %v598 = vpack.c.bf16 %v367, %v364
      %v599 = vpack.c.bf16 %v375, %v372
      %v600 = vpack.c.bf16 %v383, %v380
      %v617 = vunpack.c.l.b16 %v585
      %v618 = vunpack.c.h.b16 %v585
      %v619 = vunpack.c.l.b16 %v586
      %v620 = vunpack.c.h.b16 %v586
      %v621 = vunpack.c.l.b16 %v587
      %v622 = vunpack.c.h.b16 %v587
      %v623 = vunpack.c.l.b16 %v588
      %v624 = vunpack.c.h.b16 %v588
      %v625 = vunpack.c.l.b16 %v589
      %v626 = vunpack.c.h.b16 %v589
      %v627 = vunpack.c.l.b16 %v590
      %v628 = vunpack.c.h.b16 %v590
      %v629 = vunpack.c.l.b16 %v591
      %v630 = vunpack.c.h.b16 %v591
      %v631 = vunpack.c.l.b16 %v592
      %v632 = vunpack.c.h.b16 %v592
      %v633 = vunpack.c.l.b16 %v593
      %v634 = vunpack.c.h.b16 %v593
      %v635 = vunpack.c.l.b16 %v594
      %v636 = vunpack.c.h.b16 %v594
      %v637 = vunpack.c.l.b16 %v595
      %v638 = vunpack.c.h.b16 %v595
      %v639 = vunpack.c.l.b16 %v596
      %v640 = vunpack.c.h.b16 %v596
      %v641 = vunpack.c.l.b16 %v597
      %v642 = vunpack.c.h.b16 %v597
      %v643 = vunpack.c.l.b16 %v598
      %v644 = vunpack.c.h.b16 %v598
      %v645 = vunpack.c.l.b16 %v599
      %v646 = vunpack.c.h.b16 %v599
      %v647 = vunpack.c.l.b16 %v600
      %v648 = vunpack.c.h.b16 %v600
      %v649 = vpack.c.b16 %v617, %v617
      %v650 = vpack.c.b16 %v618, %v618
      %v651 = vpack.c.b16 %v619, %v619
      %v652 = vpack.c.b16 %v620, %v620
      %v653 = vpack.c.b16 %v621, %v621
      %v654 = vpack.c.b16 %v622, %v622
      %v655 = vpack.c.b16 %v623, %v623
      %v656 = vpack.c.b16 %v624, %v624
      %v657 = vpack.c.b16 %v625, %v625
      %v658 = vpack.c.b16 %v626, %v626
      %v659 = vpack.c.b16 %v627, %v627
      %v660 = vpack.c.b16 %v628, %v628
      %v661 = vpack.c.b16 %v629, %v629
      %v662 = vpack.c.b16 %v630, %v630
      %v663 = vpack.c.b16 %v631, %v631
      %v664 = vpack.c.b16 %v632, %v632
      %v665 = vpack.c.b16 %v633, %v633
      %v666 = vpack.c.b16 %v634, %v634
      %v667 = vpack.c.b16 %v635, %v635
      %v668 = vpack.c.b16 %v636, %v636
      %v669 = vpack.c.b16 %v637, %v637
      %v670 = vpack.c.b16 %v638, %v638
      %v671 = vpack.c.b16 %v639, %v639
      %v672 = vpack.c.b16 %v640, %v640
      %v673 = vpack.c.b16 %v641, %v641
      %v674 = vpack.c.b16 %v642, %v642
      %v675 = vpack.c.b16 %v643, %v643
      %v676 = vpack.c.b16 %v644, %v644
      %v677 = vpack.c.b16 %v645, %v645
      %v678 = vpack.c.b16 %v646, %v646
      %v679 = vpack.c.b16 %v647, %v647
      %v680 = vpack.c.b16 %v648, %v648
      %vm713 = vcmask 257024
      %714 = vst.msk [vmem:[#allocation2] sm:$0xf] %vm713, %v649
      %715 = vst.msk [vmem:[#allocation2 + $0x4] sm:$0xf] %vm713, %v650
      %716 = vst.msk [vmem:[#allocation2 + $0x8] sm:$0xf] %vm713, %v651
      %717 = vst.msk [vmem:[#allocation2 + $0xc] sm:$0xf] %vm713, %v652
      %718 = vst.msk [vmem:[#allocation2 + $0x10] sm:$0xf] %vm713, %v653
      %719 = vst.msk [vmem:[#allocation2 + $0x14] sm:$0xf] %vm713, %v654
      %720 = vst.msk [vmem:[#allocation2 + $0x18] sm:$0xf] %vm713, %v655
      %721 = vst.msk [vmem:[#allocation2 + $0x1c] sm:$0xf] %vm713, %v656
      %722 = vst.msk [vmem:[#allocation2 + $0x20] sm:$0xf] %vm713, %v657
      %723 = vst.msk [vmem:[#allocation2 + $0x24] sm:$0xf] %vm713, %v658
      %724 = vst.msk [vmem:[#allocation2 + $0x28] sm:$0xf] %vm713, %v659
      %725 = vst.msk [vmem:[#allocation2 + $0x2c] sm:$0xf] %vm713, %v660
      %726 = vst.msk [vmem:[#allocation2 + $0x30] sm:$0xf] %vm713, %v661
      %727 = vst.msk [vmem:[#allocation2 + $0x34] sm:$0xf] %vm713, %v662
      %728 = vst.msk [vmem:[#allocation2 + $0x38] sm:$0xf] %vm713, %v663
      %729 = vst.msk [vmem:[#allocation2 + $0x3c] sm:$0xf] %vm713, %v664
      %730 = vst.msk [vmem:[#allocation2 + $0x40] sm:$0xf] %vm713, %v665
      %731 = vst.msk [vmem:[#allocation2 + $0x44] sm:$0xf] %vm713, %v666
      %732 = vst.msk [vmem:[#allocation2 + $0x48] sm:$0xf] %vm713, %v667
      %733 = vst.msk [vmem:[#allocation2 + $0x4c] sm:$0xf] %vm713, %v668
      %734 = vst.msk [vmem:[#allocation2 + $0x50] sm:$0xf] %vm713, %v669
      %735 = vst.msk [vmem:[#allocation2 + $0x54] sm:$0xf] %vm713, %v670
      %736 = vst.msk [vmem:[#allocation2 + $0x58] sm:$0xf] %vm713, %v671
      %737 = vst.msk [vmem:[#allocation2 + $0x5c] sm:$0xf] %vm713, %v672
      %738 = vst.msk [vmem:[#allocation2 + $0x60] sm:$0xf] %vm713, %v673
      %739 = vst.msk [vmem:[#allocation2 + $0x64] sm:$0xf] %vm713, %v674
      %740 = vst.msk [vmem:[#allocation2 + $0x68] sm:$0xf] %vm713, %v675
      %741 = vst.msk [vmem:[#allocation2 + $0x6c] sm:$0xf] %vm713, %v676
      %742 = vst.msk [vmem:[#allocation2 + $0x70] sm:$0xf] %vm713, %v677
      %743 = vst.msk [vmem:[#allocation2 + $0x74] sm:$0xf] %vm713, %v678
      %744 = vst.msk [vmem:[#allocation2 + $0x78] sm:$0xf] %vm713, %v679
      %745 = vst.msk [vmem:[#allocation2 + $0x7c] sm:$0xf] %vm713, %v680
      %v746 = vpack.c.bf16 %v462, %v459
      %v747 = vpack.c.bf16 %v470, %v467
      %v748 = vpack.c.bf16 %v478, %v475
      %v749 = vpack.c.bf16 %v486, %v483
      %v750 = vpack.c.bf16 %v494, %v491
      %v751 = vpack.c.bf16 %v502, %v499
      %v752 = vpack.c.bf16 %v510, %v507
      %v753 = vpack.c.bf16 %v518, %v515
      %v754 = vpack.c.bf16 %v526, %v523
      %v755 = vpack.c.bf16 %v534, %v531
      %v756 = vpack.c.bf16 %v542, %v539
      %v757 = vpack.c.bf16 %v550, %v547
      %v758 = vpack.c.bf16 %v558, %v555
      %v759 = vpack.c.bf16 %v566, %v563
      %v760 = vpack.c.bf16 %v574, %v571
      %v761 = vpack.c.bf16 %v582, %v579
      %v778 = vunpack.c.l.b16 %v746
      %v779 = vunpack.c.h.b16 %v746
      %v780 = vunpack.c.l.b16 %v747
      %v781 = vunpack.c.h.b16 %v747
      %v782 = vunpack.c.l.b16 %v748
      %v783 = vunpack.c.h.b16 %v748
      %v784 = vunpack.c.l.b16 %v749
      %v785 = vunpack.c.h.b16 %v749
      %v786 = vunpack.c.l.b16 %v750
      %v787 = vunpack.c.h.b16 %v750
      %v788 = vunpack.c.l.b16 %v751
      %v789 = vunpack.c.h.b16 %v751
      %v790 = vunpack.c.l.b16 %v752
      %v791 = vunpack.c.h.b16 %v752
      %v792 = vunpack.c.l.b16 %v753
      %v793 = vunpack.c.h.b16 %v753
      %v794 = vunpack.c.l.b16 %v754
      %v795 = vunpack.c.h.b16 %v754
      %v796 = vunpack.c.l.b16 %v755
      %v797 = vunpack.c.h.b16 %v755
      %v798 = vunpack.c.l.b16 %v756
      %v799 = vunpack.c.h.b16 %v756
      %v800 = vunpack.c.l.b16 %v757
      %v801 = vunpack.c.h.b16 %v757
      %v802 = vunpack.c.l.b16 %v758
      %v803 = vunpack.c.h.b16 %v758
      %v804 = vunpack.c.l.b16 %v759
      %v805 = vunpack.c.h.b16 %v759
      %v806 = vunpack.c.l.b16 %v760
      %v807 = vunpack.c.h.b16 %v760
      %v808 = vunpack.c.l.b16 %v761
      %v809 = vunpack.c.h.b16 %v761
      %v810 = vpack.c.b16 %v778, %v778
      %v811 = vpack.c.b16 %v779, %v779
      %v812 = vpack.c.b16 %v780, %v780
      %v813 = vpack.c.b16 %v781, %v781
      %v814 = vpack.c.b16 %v782, %v782
      %v815 = vpack.c.b16 %v783, %v783
      %v816 = vpack.c.b16 %v784, %v784
      %v817 = vpack.c.b16 %v785, %v785
      %v818 = vpack.c.b16 %v786, %v786
      %v819 = vpack.c.b16 %v787, %v787
      %v820 = vpack.c.b16 %v788, %v788
      %v821 = vpack.c.b16 %v789, %v789
      %v822 = vpack.c.b16 %v790, %v790
      %v823 = vpack.c.b16 %v791, %v791
      %v824 = vpack.c.b16 %v792, %v792
      %v825 = vpack.c.b16 %v793, %v793
      %v826 = vpack.c.b16 %v794, %v794
      %v827 = vpack.c.b16 %v795, %v795
      %v828 = vpack.c.b16 %v796, %v796
      %v829 = vpack.c.b16 %v797, %v797
      %v830 = vpack.c.b16 %v798, %v798
      %v831 = vpack.c.b16 %v799, %v799
      %v832 = vpack.c.b16 %v800, %v800
      %v833 = vpack.c.b16 %v801, %v801
      %v834 = vpack.c.b16 %v802, %v802
      %v835 = vpack.c.b16 %v803, %v803
      %v836 = vpack.c.b16 %v804, %v804
      %v837 = vpack.c.b16 %v805, %v805
      %v838 = vpack.c.b16 %v806, %v806
      %v839 = vpack.c.b16 %v807, %v807
      %v840 = vpack.c.b16 %v808, %v808
      %v841 = vpack.c.b16 %v809, %v809
      %vm874 = vcmask 519168
      %875 = vst.msk [vmem:[#allocation3] sm:$0xf] %vm874, %v810
      %876 = vst.msk [vmem:[#allocation3 + $0x4] sm:$0xf] %vm874, %v811
      %877 = vst.msk [vmem:[#allocation3 + $0x8] sm:$0xf] %vm874, %v812
      %878 = vst.msk [vmem:[#allocation3 + $0xc] sm:$0xf] %vm874, %v813
      %879 = vst.msk [vmem:[#allocation3 + $0x10] sm:$0xf] %vm874, %v814
      %880 = vst.msk [vmem:[#allocation3 + $0x14] sm:$0xf] %vm874, %v815
      %881 = vst.msk [vmem:[#allocation3 + $0x18] sm:$0xf] %vm874, %v816
      %882 = vst.msk [vmem:[#allocation3 + $0x1c] sm:$0xf] %vm874, %v817
      %883 = vst.msk [vmem:[#allocation3 + $0x20] sm:$0xf] %vm874, %v818
      %884 = vst.msk [vmem:[#allocation3 + $0x24] sm:$0xf] %vm874, %v819
      %885 = vst.msk [vmem:[#allocation3 + $0x28] sm:$0xf] %vm874, %v820
      %886 = vst.msk [vmem:[#allocation3 + $0x2c] sm:$0xf] %vm874, %v821
      %887 = vst.msk [vmem:[#allocation3 + $0x30] sm:$0xf] %vm874, %v822
      %888 = vst.msk [vmem:[#allocation3 + $0x34] sm:$0xf] %vm874, %v823
      %889 = vst.msk [vmem:[#allocation3 + $0x38] sm:$0xf] %vm874, %v824
      %890 = vst.msk [vmem:[#allocation3 + $0x3c] sm:$0xf] %vm874, %v825
      %891 = vst.msk [vmem:[#allocation3 + $0x40] sm:$0xf] %vm874, %v826
      %892 = vst.msk [vmem:[#allocation3 + $0x44] sm:$0xf] %vm874, %v827
      %893 = vst.msk [vmem:[#allocation3 + $0x48] sm:$0xf] %vm874, %v828
      %894 = vst.msk [vmem:[#allocation3 + $0x4c] sm:$0xf] %vm874, %v829
      %895 = vst.msk [vmem:[#allocation3 + $0x50] sm:$0xf] %vm874, %v830
      %896 = vst.msk [vmem:[#allocation3 + $0x54] sm:$0xf] %vm874, %v831
      %897 = vst.msk [vmem:[#allocation3 + $0x58] sm:$0xf] %vm874, %v832
      %898 = vst.msk [vmem:[#allocation3 + $0x5c] sm:$0xf] %vm874, %v833
      %899 = vst.msk [vmem:[#allocation3 + $0x60] sm:$0xf] %vm874, %v834
      %900 = vst.msk [vmem:[#allocation3 + $0x64] sm:$0xf] %vm874, %v835
      %901 = vst.msk [vmem:[#allocation3 + $0x68] sm:$0xf] %vm874, %v836
      %902 = vst.msk [vmem:[#allocation3 + $0x6c] sm:$0xf] %vm874, %v837
      %903 = vst.msk [vmem:[#allocation3 + $0x70] sm:$0xf] %vm874, %v838
      %904 = vst.msk [vmem:[#allocation3 + $0x74] sm:$0xf] %vm874, %v839
      %905 = vst.msk [vmem:[#allocation3 + $0x78] sm:$0xf] %vm874, %v840
      %906 = vst.msk [vmem:[#allocation3 + $0x7c] sm:$0xf] %vm874, %v841
    $region25: #{tpu_custom_call.1} parent=1 // pred_fallthru
      _
    %v907 = vld [vmem:[%s0] sm:$0xf]
    %v908 = vld [vmem:[%s0 + $0x4] sm:$0xf]
    %v909 = vld [vmem:[%s0 + $0x8] sm:$0xf]
    %v910 = vld [vmem:[%s0 + $0xc] sm:$0xf]
    %v911 = vld [vmem:[%s0 + $0x10] sm:$0xf]
    %v912 = vld [vmem:[%s0 + $0x14] sm:$0xf]
    %v913 = vld [vmem:[%s0 + $0x18] sm:$0xf]
    %v914 = vld [vmem:[%s0 + $0x1c] sm:$0xf]
    %v915 = vld [vmem:[%s0 + $0x20] sm:$0xf]
    %v916 = vld [vmem:[%s0 + $0x24] sm:$0xf]
    %v917 = vld [vmem:[%s0 + $0x28] sm:$0xf]
    %v918 = vld [vmem:[%s0 + $0x2c] sm:$0xf]
    %v919 = vld [vmem:[%s0 + $0x30] sm:$0xf]
    %v920 = vld [vmem:[%s0 + $0x34] sm:$0xf]
    %v921 = vld [vmem:[%s0 + $0x38] sm:$0xf]
    %v922 = vld [vmem:[%s0 + $0x3c] sm:$0xf]
    %v923 = vld [vmem:[%s2] sm:$0xf]
    %v924 = vld [vmem:[%s2 + $0x4] sm:$0xf]
    %v925 = vld [vmem:[%s2 + $0x8] sm:$0xf]
    %v926 = vld [vmem:[%s2 + $0xc] sm:$0xf]
    %v927 = vld [vmem:[%s2 + $0x10] sm:$0xf]
    %v928 = vld [vmem:[%s2 + $0x14] sm:$0xf]
    %v929 = vld [vmem:[%s2 + $0x18] sm:$0xf]
    %v930 = vld [vmem:[%s2 + $0x1c] sm:$0xf]
    %v947 = vunpack.c.l.b16 %v907
    %v948 = vunpack.c.l.b16 %v908
    %v949 = vunpack.c.l.b16 %v909
    %v950 = vunpack.c.l.b16 %v910
    %v951 = vunpack.c.l.b16 %v911
    %v952 = vunpack.c.l.b16 %v912
    %v953 = vunpack.c.l.b16 %v913
    %v954 = vunpack.c.l.b16 %v914
    %v955 = vunpack.c.l.b16 %v915
    %v956 = vunpack.c.l.b16 %v916
    %v957 = vunpack.c.l.b16 %v917
    %v958 = vunpack.c.l.b16 %v918
    %v959 = vunpack.c.l.b16 %v919
    %v960 = vunpack.c.l.b16 %v920
    %v961 = vunpack.c.l.b16 %v921
    %v962 = vunpack.c.l.b16 %v922
    %v963 = vpack.c.b16 %v948, %v947
    %v964 = vpack.c.b16 %v950, %v949
    %v965 = vpack.c.b16 %v952, %v951
    %v966 = vpack.c.b16 %v954, %v953
    %v967 = vpack.c.b16 %v956, %v955
    %v968 = vpack.c.b16 %v958, %v957
    %v969 = vpack.c.b16 %v960, %v959
    %v970 = vpack.c.b16 %v962, %v961
    %v979 = vunpack.c.l.b16 %v923
    %v980 = vunpack.c.l.b16 %v924
    %v981 = vunpack.c.l.b16 %v925
    %v982 = vunpack.c.l.b16 %v926
    %v983 = vunpack.c.l.b16 %v927
    %v984 = vunpack.c.l.b16 %v928
    %v985 = vunpack.c.l.b16 %v929
    %v986 = vunpack.c.l.b16 %v930
    %v987 = vpack.c.b16 %v980, %v979
    %v988 = vpack.c.b16 %v982, %v981
    %v989 = vpack.c.b16 %v984, %v983
    %v990 = vpack.c.b16 %v986, %v985
    %vm995 = vcmask 523264
    %v997 = vsel %vm995, %v963, 0
    %v1000 = vsel %vm995, %v964, 0
    %v1003 = vsel %vm995, %v965, 0
    %v1006 = vsel %vm995, %v966, 0
    %v1009 = vsel %vm995, %v967, 0
    %v1012 = vsel %vm995, %v968, 0
    %v1015 = vsel %vm995, %v969, 0
    %v1018 = vsel %vm995, %v970, 0
    %1020 = vmatprep.subr.bf16.mxu0 0
    %1021 = vmatpush1.bf16.msra.mxu0 0
    %1022 = vmatprep.subr.bf16.mxu0 0
    %1023 = vmatpush1.bf16.msra.mxu0 0
    %1024 = vmatprep.subr.bf16.mxu0 0
    %1025 = vmatpush1.bf16.msra.mxu0 0
    %1026 = vmatprep.subr.bf16.mxu0 0
    %1027 = vmatpush1.bf16.msra.mxu0 0
    %1028 = vmatprep.subr.bf16.mxu0 0
    %1029 = vmatpush1.bf16.msra.mxu0 %v990
    %1030 = vmatprep.subr.bf16.mxu0 0
    %1031 = vmatpush1.bf16.msra.mxu0 %v989
    %1032 = vmatprep.subr.bf16.mxu0 0
    %1033 = vmatpush1.bf16.msra.mxu0 %v988
    %1034 = vmatprep.subr.bf16.mxu0 0
    %1035 = vmatpush1.bf16.msra.mxu0 %v987
    %1036 = vmatprep.subr.bf16.mxu0 0
    %1037 = vmatpush2.bf16.msra.mxu0 0
    %1038 = vmatprep.subr.bf16.mxu0 0
    %1039 = vmatpush2.bf16.msra.mxu0 0
    %1040 = vmatprep.subr.bf16.mxu0 0
    %1041 = vmatpush2.bf16.msra.mxu0 0
    %1042 = vmatprep.subr.bf16.mxu0 0
    %1043 = vmatpush2.bf16.msra.mxu0 0
    %1044 = vmatprep.subr.bf16.mxu0 0
    %1045 = vmatpush2.bf16.msra.mxu0 0
    %1046 = vmatprep.subr.bf16.mxu0 0
    %1047 = vmatpush2.bf16.msra.mxu0 0
    %1048 = vmatprep.subr.bf16.mxu0 0
    %1049 = vmatpush2.bf16.msra.mxu0 0
    %1050 = vmatprep.subr.bf16.mxu0 0
    %1051 = vmatpush2.bf16.msra.mxu0 0
    %1052 = vmatprep.mubr.bf16.mxu0 0
    %1053 = vmatmul.mubr.bf16.gmra.mxu0 %v997
    %v1054 = vpop.f32.mrf.mxu0
    %v1055 = vadd.f32 0.0, %v1054
    %v1056 = vpop.f32.mrf.mxu0
    %v1057 = vpop.f32.mrf.mxu0
    %v1058 = vadd.f32 0.0, %v1057
    %v1059 = vpop.f32.mrf.mxu0
    %1060 = vmatprep.mubr.bf16.mxu0 0
    %1061 = vmatmul.mubr.bf16.gmra.mxu0 %v1000
    %v1062 = vpop.f32.mrf.mxu0
    %v1063 = vadd.f32 0.0, %v1062
    %v1064 = vpop.f32.mrf.mxu0
    %v1065 = vpop.f32.mrf.mxu0
    %v1066 = vadd.f32 0.0, %v1065
    %v1067 = vpop.f32.mrf.mxu0
    %1068 = vmatprep.mubr.bf16.mxu0 0
    %1069 = vmatmul.mubr.bf16.gmra.mxu0 %v1003
    %v1070 = vpop.f32.mrf.mxu0
    %v1071 = vadd.f32 0.0, %v1070
    %v1072 = vpop.f32.mrf.mxu0
    %v1073 = vpop.f32.mrf.mxu0
    %v1074 = vadd.f32 0.0, %v1073
    %v1075 = vpop.f32.mrf.mxu0
    %1076 = vmatprep.mubr.bf16.mxu0 0
    %1077 = vmatmul.mubr.bf16.gmra.mxu0 %v1006
    %v1078 = vpop.f32.mrf.mxu0
    %v1079 = vadd.f32 0.0, %v1078
    %v1080 = vpop.f32.mrf.mxu0
    %v1081 = vpop.f32.mrf.mxu0
    %v1082 = vadd.f32 0.0, %v1081
    %v1083 = vpop.f32.mrf.mxu0
    %1084 = vmatprep.mubr.bf16.mxu0 0
    %1085 = vmatmul.mubr.bf16.gmra.mxu0 %v1009
    %v1086 = vpop.f32.mrf.mxu0
    %v1087 = vadd.f32 0.0, %v1086
    %v1088 = vpop.f32.mrf.mxu0
    %v1089 = vpop.f32.mrf.mxu0
    %v1090 = vadd.f32 0.0, %v1089
    %v1091 = vpop.f32.mrf.mxu0
    %1092 = vmatprep.mubr.bf16.mxu0 0
    %1093 = vmatmul.mubr.bf16.gmra.mxu0 %v1012
    %v1094 = vpop.f32.mrf.mxu0
    %v1095 = vadd.f32 0.0, %v1094
    %v1096 = vpop.f32.mrf.mxu0
    %v1097 = vpop.f32.mrf.mxu0
    %v1098 = vadd.f32 0.0, %v1097
    %v1099 = vpop.f32.mrf.mxu0
    %1100 = vmatprep.mubr.bf16.mxu0 0
    %1101 = vmatmul.mubr.bf16.gmra.mxu0 %v1015
    %v1102 = vpop.f32.mrf.mxu0
    %v1103 = vadd.f32 0.0, %v1102
    %v1104 = vpop.f32.mrf.mxu0
    %v1105 = vpop.f32.mrf.mxu0
    %v1106 = vadd.f32 0.0, %v1105
    %v1107 = vpop.f32.mrf.mxu0
    %1108 = vmatprep.mubr.bf16.mxu0 0
    %1109 = vmatmul.mubr.bf16.gmra.mxu0 %v1018
    %v1110 = vpop.f32.mrf.mxu0
    %v1111 = vadd.f32 0.0, %v1110
    %v1112 = vpop.f32.mrf.mxu0
    %v1113 = vpop.f32.mrf.mxu0
    %v1114 = vadd.f32 0.0, %v1113
    %v1115 = vpop.f32.mrf.mxu0
    %1116 = vdwg.mxu0
    %v1117 = vpack.c.bf16 %v1058, %v1055
    %v1118 = vpack.c.bf16 %v1066, %v1063
    %v1119 = vpack.c.bf16 %v1074, %v1071
    %v1120 = vpack.c.bf16 %v1082, %v1079
    %v1121 = vpack.c.bf16 %v1090, %v1087
    %v1122 = vpack.c.bf16 %v1098, %v1095
    %v1123 = vpack.c.bf16 %v1106, %v1103
    %v1124 = vpack.c.bf16 %v1114, %v1111
    %v1125 = vld [vmem:[#allocation2] sm:$0xf]
    %v1126 = vld [vmem:[#allocation2 + $0x4] sm:$0xf]
    %v1127 = vld [vmem:[#allocation2 + $0x8] sm:$0xf]
    %v1128 = vld [vmem:[#allocation2 + $0xc] sm:$0xf]
    %v1129 = vld [vmem:[#allocation2 + $0x10] sm:$0xf]
    %v1130 = vld [vmem:[#allocation2 + $0x14] sm:$0xf]
    %v1131 = vld [vmem:[#allocation2 + $0x18] sm:$0xf]
    %v1132 = vld [vmem:[#allocation2 + $0x1c] sm:$0xf]
    %v1133 = vld [vmem:[#allocation2 + $0x20] sm:$0xf]
    %v1134 = vld [vmem:[#allocation2 + $0x24] sm:$0xf]
    %v1135 = vld [vmem:[#allocation2 + $0x28] sm:$0xf]
    %v1136 = vld [vmem:[#allocation2 + $0x2c] sm:$0xf]
    %v1137 = vld [vmem:[#allocation2 + $0x30] sm:$0xf]
    %v1138 = vld [vmem:[#allocation2 + $0x34] sm:$0xf]
    %v1139 = vld [vmem:[#allocation2 + $0x38] sm:$0xf]
    %v1140 = vld [vmem:[#allocation2 + $0x3c] sm:$0xf]
    %v1141 = vld [vmem:[#allocation2 + $0x40] sm:$0xf]
    %v1142 = vld [vmem:[#allocation2 + $0x44] sm:$0xf]
    %v1143 = vld [vmem:[#allocation2 + $0x48] sm:$0xf]
    %v1144 = vld [vmem:[#allocation2 + $0x4c] sm:$0xf]
    %v1145 = vld [vmem:[#allocation2 + $0x50] sm:$0xf]
    %v1146 = vld [vmem:[#allocation2 + $0x54] sm:$0xf]
    %v1147 = vld [vmem:[#allocation2 + $0x58] sm:$0xf]
    %v1148 = vld [vmem:[#allocation2 + $0x5c] sm:$0xf]
    %v1149 = vld [vmem:[#allocation2 + $0x60] sm:$0xf]
    %v1150 = vld [vmem:[#allocation2 + $0x64] sm:$0xf]
    %v1151 = vld [vmem:[#allocation2 + $0x68] sm:$0xf]
    %v1152 = vld [vmem:[#allocation2 + $0x6c] sm:$0xf]
    %v1153 = vld [vmem:[#allocation2 + $0x70] sm:$0xf]
    %v1154 = vld [vmem:[#allocation2 + $0x74] sm:$0xf]
    %v1155 = vld [vmem:[#allocation2 + $0x78] sm:$0xf]
    %v1156 = vld [vmem:[#allocation2 + $0x7c] sm:$0xf]
    %v1157 = vld [vmem:[#allocation3] sm:$0xf]
    %v1158 = vld [vmem:[#allocation3 + $0x4] sm:$0xf]
    %v1159 = vld [vmem:[#allocation3 + $0x8] sm:$0xf]
    %v1160 = vld [vmem:[#allocation3 + $0xc] sm:$0xf]
    %v1161 = vld [vmem:[#allocation3 + $0x10] sm:$0xf]
    %v1162 = vld [vmem:[#allocation3 + $0x14] sm:$0xf]
    %v1163 = vld [vmem:[#allocation3 + $0x18] sm:$0xf]
    %v1164 = vld [vmem:[#allocation3 + $0x1c] sm:$0xf]
    %v1165 = vld [vmem:[#allocation3 + $0x20] sm:$0xf]
    %v1166 = vld [vmem:[#allocation3 + $0x24] sm:$0xf]
    %v1167 = vld [vmem:[#allocation3 + $0x28] sm:$0xf]
    %v1168 = vld [vmem:[#allocation3 + $0x2c] sm:$0xf]
    %v1169 = vld [vmem:[#allocation3 + $0x30] sm:$0xf]
    %v1170 = vld [vmem:[#allocation3 + $0x34] sm:$0xf]
    %v1171 = vld [vmem:[#allocation3 + $0x38] sm:$0xf]
    %v1172 = vld [vmem:[#allocation3 + $0x3c] sm:$0xf]
    %v1173 = vld [vmem:[#allocation3 + $0x40] sm:$0xf]
    %v1174 = vld [vmem:[#allocation3 + $0x44] sm:$0xf]
    %v1175 = vld [vmem:[#allocation3 + $0x48] sm:$0xf]
    %v1176 = vld [vmem:[#allocation3 + $0x4c] sm:$0xf]
    %v1177 = vld [vmem:[#allocation3 + $0x50] sm:$0xf]
    %v1178 = vld [vmem:[#allocation3 + $0x54] sm:$0xf]
    %v1179 = vld [vmem:[#allocation3 + $0x58] sm:$0xf]
    %v1180 = vld [vmem:[#allocation3 + $0x5c] sm:$0xf]
    %v1181 = vld [vmem:[#allocation3 + $0x60] sm:$0xf]
    %v1182 = vld [vmem:[#allocation3 + $0x64] sm:$0xf]
    %v1183 = vld [vmem:[#allocation3 + $0x68] sm:$0xf]
    %v1184 = vld [vmem:[#allocation3 + $0x6c] sm:$0xf]
    %v1185 = vld [vmem:[#allocation3 + $0x70] sm:$0xf]
    %v1186 = vld [vmem:[#allocation3 + $0x74] sm:$0xf]
    %v1187 = vld [vmem:[#allocation3 + $0x78] sm:$0xf]
    %v1188 = vld [vmem:[#allocation3 + $0x7c] sm:$0xf]
    %v1205 = vunpack.c.l.b16 %v1125
    %v1206 = vunpack.c.l.b16 %v1126
    %v1207 = vunpack.c.l.b16 %v1127
    %v1208 = vunpack.c.l.b16 %v1128
    %v1209 = vunpack.c.l.b16 %v1129
    %v1210 = vunpack.c.l.b16 %v1130
    %v1211 = vunpack.c.l.b16 %v1131
    %v1212 = vunpack.c.l.b16 %v1132
    %v1213 = vunpack.c.l.b16 %v1133
    %v1214 = vunpack.c.l.b16 %v1134
    %v1215 = vunpack.c.l.b16 %v1135
    %v1216 = vunpack.c.l.b16 %v1136
    %v1217 = vunpack.c.l.b16 %v1137
    %v1218 = vunpack.c.l.b16 %v1138
    %v1219 = vunpack.c.l.b16 %v1139
    %v1220 = vunpack.c.l.b16 %v1140
    %v1221 = vpack.c.b16 %v1206, %v1205
    %v1222 = vpack.c.b16 %v1208, %v1207
    %v1223 = vpack.c.b16 %v1210, %v1209
    %v1224 = vpack.c.b16 %v1212, %v1211
    %v1225 = vpack.c.b16 %v1214, %v1213
    %v1226 = vpack.c.b16 %v1216, %v1215
    %v1227 = vpack.c.b16 %v1218, %v1217
    %v1228 = vpack.c.b16 %v1220, %v1219
    %vm1229 = vcmask 261120
    %v1231 = vsel %vm1229, %v1117, 0
    %v1234 = vsel %vm1229, %v1118, 0
    %v1237 = vsel %vm1229, %v1119, 0
    %v1240 = vsel %vm1229, %v1120, 0
    %v1243 = vsel %vm1229, %v1221, 0
    %v1246 = vsel %vm1229, %v1222, 0
    %v1249 = vsel %vm1229, %v1223, 0
    %v1252 = vsel %vm1229, %v1224, 0
    %v1255 = vsel %vm1229, %v1225, 0
    %v1258 = vsel %vm1229, %v1226, 0
    %v1261 = vsel %vm1229, %v1227, 0
    %v1264 = vsel %vm1229, %v1228, 0
    %1266 = vmatprep.subr.bf16.mxu0 0
    %1267 = vmatpush1.bf16.xpose.msra.mxu0 %v1264
    %1268 = vmatprep.subr.bf16.mxu0 0
    %1269 = vmatpush1.bf16.xpose.msra.mxu0 %v1261
    %1270 = vmatprep.subr.bf16.mxu0 0
    %1271 = vmatpush1.bf16.xpose.msra.mxu0 %v1258
    %1272 = vmatprep.subr.bf16.mxu0 0
    %1273 = vmatpush1.bf16.xpose.msra.mxu0 %v1255
    %1274 = vmatprep.subr.bf16.mxu0 0
    %1275 = vmatpush1.bf16.xpose.msra.mxu0 %v1252
    %1276 = vmatprep.subr.bf16.mxu0 0
    %1277 = vmatpush1.bf16.xpose.msra.mxu0 %v1249
    %1278 = vmatprep.subr.bf16.mxu0 0
    %1279 = vmatpush1.bf16.xpose.msra.mxu0 %v1246
    %1280 = vmatprep.subr.bf16.mxu0 0
    %1281 = vmatpush1.bf16.xpose.msra.mxu0 %v1243
    %1282 = vmatprep.subr.bf16.mxu0 0
    %1283 = vmatpush2.bf16.xpose.msra.mxu0 0
    %1284 = vmatprep.subr.bf16.mxu0 0
    %1285 = vmatpush2.bf16.xpose.msra.mxu0 0
    %1286 = vmatprep.subr.bf16.mxu0 0
    %1287 = vmatpush2.bf16.xpose.msra.mxu0 0
    %1288 = vmatprep.subr.bf16.mxu0 0
    %1289 = vmatpush2.bf16.xpose.msra.mxu0 0
    %1290 = vmatprep.subr.bf16.mxu0 0
    %1291 = vmatpush2.bf16.xpose.msra.mxu0 0
    %1292 = vmatprep.subr.bf16.mxu0 0
    %1293 = vmatpush2.bf16.xpose.msra.mxu0 0
    %1294 = vmatprep.subr.bf16.mxu0 0
    %1295 = vmatpush2.bf16.xpose.msra.mxu0 0
    %1296 = vmatprep.subr.bf16.mxu0 0
    %1297 = vmatpush2.bf16.xpose.msra.mxu0 0
    %1298 = vmatprep.mubr.bf16.mxu0 0
    %1299 = vmatmul.mubr.bf16.gmra.mxu0 %v1231
    %v1300 = vpop.f32.mrf.mxu0
    %v1301 = vadd.f32 0.0, %v1300
    %v1302 = vpop.f32.mrf.mxu0
    %v1303 = vpop.f32.mrf.mxu0
    %v1304 = vadd.f32 0.0, %v1303
    %v1305 = vpop.f32.mrf.mxu0
    %1306 = vmatprep.mubr.bf16.mxu0 0
    %1307 = vmatmul.mubr.bf16.gmra.mxu0 %v1234
    %v1308 = vpop.f32.mrf.mxu0
    %v1309 = vadd.f32 0.0, %v1308
    %v1310 = vpop.f32.mrf.mxu0
    %v1311 = vpop.f32.mrf.mxu0
    %v1312 = vadd.f32 0.0, %v1311
    %v1313 = vpop.f32.mrf.mxu0
    %1314 = vmatprep.mubr.bf16.mxu0 0
    %1315 = vmatmul.mubr.bf16.gmra.mxu0 %v1237
    %v1316 = vpop.f32.mrf.mxu0
    %v1317 = vadd.f32 0.0, %v1316
    %v1318 = vpop.f32.mrf.mxu0
    %v1319 = vpop.f32.mrf.mxu0
    %v1320 = vadd.f32 0.0, %v1319
    %v1321 = vpop.f32.mrf.mxu0
    %1322 = vmatprep.mubr.bf16.mxu0 0
    %1323 = vmatmul.mubr.bf16.gmra.mxu0 %v1240
    %v1324 = vpop.f32.mrf.mxu0
    %v1325 = vadd.f32 0.0, %v1324
    %v1326 = vpop.f32.mrf.mxu0
    %v1327 = vpop.f32.mrf.mxu0
    %v1328 = vadd.f32 0.0, %v1327
    %v1329 = vpop.f32.mrf.mxu0
    %1330 = vdwg.mxu0
    %v1347 = vunpack.c.l.b16 %v1141
    %v1348 = vunpack.c.l.b16 %v1142
    %v1349 = vunpack.c.l.b16 %v1143
    %v1350 = vunpack.c.l.b16 %v1144
    %v1351 = vunpack.c.l.b16 %v1145
    %v1352 = vunpack.c.l.b16 %v1146
    %v1353 = vunpack.c.l.b16 %v1147
    %v1354 = vunpack.c.l.b16 %v1148
    %v1355 = vunpack.c.l.b16 %v1149
    %v1356 = vunpack.c.l.b16 %v1150
    %v1357 = vunpack.c.l.b16 %v1151
    %v1358 = vunpack.c.l.b16 %v1152
    %v1359 = vunpack.c.l.b16 %v1153
    %v1360 = vunpack.c.l.b16 %v1154
    %v1361 = vunpack.c.l.b16 %v1155
    %v1362 = vunpack.c.l.b16 %v1156
    %v1363 = vpack.c.b16 %v1348, %v1347
    %v1364 = vpack.c.b16 %v1350, %v1349
    %v1365 = vpack.c.b16 %v1352, %v1351
    %v1366 = vpack.c.b16 %v1354, %v1353
    %v1367 = vpack.c.b16 %v1356, %v1355
    %v1368 = vpack.c.b16 %v1358, %v1357
    %v1369 = vpack.c.b16 %v1360, %v1359
    %v1370 = vpack.c.b16 %v1362, %v1361
    %v1372 = vsel %vm1229, %v1121, 0
    %v1375 = vsel %vm1229, %v1122, 0
    %v1378 = vsel %vm1229, %v1123, 0
    %v1381 = vsel %vm1229, %v1124, 0
    %v1384 = vsel %vm1229, %v1363, 0
    %v1387 = vsel %vm1229, %v1364, 0
    %v1390 = vsel %vm1229, %v1365, 0
    %v1393 = vsel %vm1229, %v1366, 0
    %v1396 = vsel %vm1229, %v1367, 0
    %v1399 = vsel %vm1229, %v1368, 0
    %v1402 = vsel %vm1229, %v1369, 0
    %v1405 = vsel %vm1229, %v1370, 0
    %1407 = vmatprep.subr.bf16.mxu0 0
    %1408 = vmatpush1.bf16.xpose.msra.mxu0 %v1405
    %1409 = vmatprep.subr.bf16.mxu0 0
    %1410 = vmatpush1.bf16.xpose.msra.mxu0 %v1402
    %1411 = vmatprep.subr.bf16.mxu0 0
    %1412 = vmatpush1.bf16.xpose.msra.mxu0 %v1399
    %1413 = vmatprep.subr.bf16.mxu0 0
    %1414 = vmatpush1.bf16.xpose.msra.mxu0 %v1396
    %1415 = vmatprep.subr.bf16.mxu0 0
    %1416 = vmatpush1.bf16.xpose.msra.mxu0 %v1393
    %1417 = vmatprep.subr.bf16.mxu0 0
    %1418 = vmatpush1.bf16.xpose.msra.mxu0 %v1390
    %1419 = vmatprep.subr.bf16.mxu0 0
    %1420 = vmatpush1.bf16.xpose.msra.mxu0 %v1387
    %1421 = vmatprep.subr.bf16.mxu0 0
    %1422 = vmatpush1.bf16.xpose.msra.mxu0 %v1384
    %1423 = vmatprep.subr.bf16.mxu0 0
    %1424 = vmatpush2.bf16.xpose.msra.mxu0 0
    %1425 = vmatprep.subr.bf16.mxu0 0
    %1426 = vmatpush2.bf16.xpose.msra.mxu0 0
    %1427 = vmatprep.subr.bf16.mxu0 0
    %1428 = vmatpush2.bf16.xpose.msra.mxu0 0
    %1429 = vmatprep.subr.bf16.mxu0 0
    %1430 = vmatpush2.bf16.xpose.msra.mxu0 0
    %1431 = vmatprep.subr.bf16.mxu0 0
    %1432 = vmatpush2.bf16.xpose.msra.mxu0 0
    %1433 = vmatprep.subr.bf16.mxu0 0
    %1434 = vmatpush2.bf16.xpose.msra.mxu0 0
    %1435 = vmatprep.subr.bf16.mxu0 0
    %1436 = vmatpush2.bf16.xpose.msra.mxu0 0
    %1437 = vmatprep.subr.bf16.mxu0 0
    %1438 = vmatpush2.bf16.xpose.msra.mxu0 0
    %1439 = vmatprep.mubr.bf16.mxu0 0
    %1440 = vmatmul.mubr.bf16.gmra.mxu0 %v1372
    %v1441 = vpop.f32.mrf.mxu0
    %v1442 = vadd.f32 0.0, %v1441
    %v1443 = vpop.f32.mrf.mxu0
    %v1444 = vpop.f32.mrf.mxu0
    %v1445 = vadd.f32 0.0, %v1444
    %v1446 = vpop.f32.mrf.mxu0
    %1447 = vmatprep.mubr.bf16.mxu0 0
    %1448 = vmatmul.mubr.bf16.gmra.mxu0 %v1375
    %v1449 = vpop.f32.mrf.mxu0
    %v1450 = vadd.f32 0.0, %v1449
    %v1451 = vpop.f32.mrf.mxu0
    %v1452 = vpop.f32.mrf.mxu0
    %v1453 = vadd.f32 0.0, %v1452
    %v1454 = vpop.f32.mrf.mxu0
    %1455 = vmatprep.mubr.bf16.mxu0 0
    %1456 = vmatmul.mubr.bf16.gmra.mxu0 %v1378
    %v1457 = vpop.f32.mrf.mxu0
    %v1458 = vadd.f32 0.0, %v1457
    %v1459 = vpop.f32.mrf.mxu0
    %v1460 = vpop.f32.mrf.mxu0
    %v1461 = vadd.f32 0.0, %v1460
    %v1462 = vpop.f32.mrf.mxu0
    %1463 = vmatprep.mubr.bf16.mxu0 0
    %1464 = vmatmul.mubr.bf16.gmra.mxu0 %v1381
    %v1465 = vpop.f32.mrf.mxu0
    %v1466 = vadd.f32 0.0, %v1465
    %v1467 = vpop.f32.mrf.mxu0
    %v1468 = vpop.f32.mrf.mxu0
    %v1469 = vadd.f32 0.0, %v1468
    %v1470 = vpop.f32.mrf.mxu0
    %1471 = vdwg.mxu0
    %v1472 = vlaneseq
    %v1473 = vand.u32 %v1472, 127
    %vm1474 = vcmp.lt.s32.totalorder %v1473, 77
    %v1475 = vsel %vm1474, %v1301, -1e+30
    %v1476 = vsel %vm1474, %v1304, -1e+30
    %v1477 = vsel %vm1474, %v1309, -1e+30
    %v1478 = vsel %vm1474, %v1312, -1e+30
    %v1479 = vsel %vm1474, %v1317, -1e+30
    %v1480 = vsel %vm1474, %v1320, -1e+30
    %v1481 = vsel %vm1474, %v1325, -1e+30
    %v1482 = vsel %vm1474, %v1328, -1e+30
    %v1483 = vsel %vm1474, %v1442, -1e+30
    %v1484 = vsel %vm1474, %v1445, -1e+30
    %v1485 = vsel %vm1474, %v1450, -1e+30
    %v1486 = vsel %vm1474, %v1453, -1e+30
    %v1487 = vsel %vm1474, %v1458, -1e+30
    %v1488 = vsel %vm1474, %v1461, -1e+30
    %v1489 = vsel %vm1474, %v1466, -1e+30
    %v1490 = vsel %vm1474, %v1469, -1e+30
    %1491 = vmax.xlane.f32.xlu0 %v1475
    %v1492 = vpop.xlane.xlu0 %1491
    %1493 = vmax.xlane.f32.xlu0 %v1476
    %v1494 = vpop.xlane.xlu0 %1493
    %1495 = vmax.xlane.f32.xlu0 %v1477
    %v1496 = vpop.xlane.xlu0 %1495
    %1497 = vmax.xlane.f32.xlu0 %v1478
    %v1498 = vpop.xlane.xlu0 %1497
    %1499 = vmax.xlane.f32.xlu0 %v1479
    %v1500 = vpop.xlane.xlu0 %1499
    %1501 = vmax.xlane.f32.xlu0 %v1480
    %v1502 = vpop.xlane.xlu0 %1501
    %1503 = vmax.xlane.f32.xlu0 %v1481
    %v1504 = vpop.xlane.xlu0 %1503
    %1505 = vmax.xlane.f32.xlu0 %v1482
    %v1506 = vpop.xlane.xlu0 %1505
    %1507 = vmax.xlane.f32.xlu0 %v1483
    %v1508 = vpop.xlane.xlu0 %1507
    %1509 = vmax.xlane.f32.xlu0 %v1484
    %v1510 = vpop.xlane.xlu0 %1509
    %1511 = vmax.xlane.f32.xlu0 %v1485
    %v1512 = vpop.xlane.xlu0 %1511
    %1513 = vmax.xlane.f32.xlu0 %v1486
    %v1514 = vpop.xlane.xlu0 %1513
    %1515 = vmax.xlane.f32.xlu0 %v1487
    %v1516 = vpop.xlane.xlu0 %1515
    %1517 = vmax.xlane.f32.xlu0 %v1488
    %v1518 = vpop.xlane.xlu0 %1517
    %1519 = vmax.xlane.f32.xlu0 %v1489
    %v1520 = vpop.xlane.xlu0 %1519
    %1521 = vmax.xlane.f32.xlu0 %v1490
    %v1522 = vpop.xlane.xlu0 %1521
    %v1523 = vsub.f32 %v1475, %v1492
    %v1524 = vsub.f32 %v1476, %v1494
    %v1525 = vsub.f32 %v1477, %v1496
    %v1526 = vsub.f32 %v1478, %v1498
    %v1527 = vsub.f32 %v1479, %v1500
    %v1528 = vsub.f32 %v1480, %v1502
    %v1529 = vsub.f32 %v1481, %v1504
    %v1530 = vsub.f32 %v1482, %v1506
    %v1531 = vsub.f32 %v1483, %v1508
    %v1532 = vsub.f32 %v1484, %v1510
    %v1533 = vsub.f32 %v1485, %v1512
    %v1534 = vsub.f32 %v1486, %v1514
    %v1535 = vsub.f32 %v1487, %v1516
    %v1536 = vsub.f32 %v1488, %v1518
    %v1537 = vsub.f32 %v1489, %v1520
    %v1538 = vsub.f32 %v1490, %v1522
    %v1539 = vmul.f32 %v1523, 1.442695
    %v1540 = vpow.pop %v1539
    %v1541 = vmul.f32 %v1524, 1.442695
    %v1542 = vpow.pop %v1541
    %v1543 = vmul.f32 %v1525, 1.442695
    %v1544 = vpow.pop %v1543
    %v1545 = vmul.f32 %v1526, 1.442695
    %v1546 = vpow.pop %v1545
    %v1547 = vmul.f32 %v1527, 1.442695
    %v1548 = vpow.pop %v1547
    %v1549 = vmul.f32 %v1528, 1.442695
    %v1550 = vpow.pop %v1549
    %v1551 = vmul.f32 %v1529, 1.442695
    %v1552 = vpow.pop %v1551
    %v1553 = vmul.f32 %v1530, 1.442695
    %v1554 = vpow.pop %v1553
    %v1555 = vmul.f32 %v1531, 1.442695
    %v1556 = vpow.pop %v1555
    %v1557 = vmul.f32 %v1532, 1.442695
    %v1558 = vpow.pop %v1557
    %v1559 = vmul.f32 %v1533, 1.442695
    %v1560 = vpow.pop %v1559
    %v1561 = vmul.f32 %v1534, 1.442695
    %v1562 = vpow.pop %v1561
    %v1563 = vmul.f32 %v1535, 1.442695
    %v1564 = vpow.pop %v1563
    %v1565 = vmul.f32 %v1536, 1.442695
    %v1566 = vpow.pop %v1565
    %v1567 = vmul.f32 %v1537, 1.442695
    %v1568 = vpow.pop %v1567
    %v1569 = vmul.f32 %v1538, 1.442695
    %v1570 = vpow.pop %v1569
    %1571 = vadd.xlane.f32.xlu0 %v1540
    %v1572 = vpop.xlane.xlu0 %1571
    %1573 = vadd.xlane.f32.xlu0 %v1542
    %v1574 = vpop.xlane.xlu0 %1573
    %1575 = vadd.xlane.f32.xlu0 %v1544
    %v1576 = vpop.xlane.xlu0 %1575
    %1577 = vadd.xlane.f32.xlu0 %v1546
    %v1578 = vpop.xlane.xlu0 %1577
    %1579 = vadd.xlane.f32.xlu0 %v1548
    %v1580 = vpop.xlane.xlu0 %1579
    %1581 = vadd.xlane.f32.xlu0 %v1550
    %v1582 = vpop.xlane.xlu0 %1581
    %1583 = vadd.xlane.f32.xlu0 %v1552
    %v1584 = vpop.xlane.xlu0 %1583
    %1585 = vadd.xlane.f32.xlu0 %v1554
    %v1586 = vpop.xlane.xlu0 %1585
    %1587 = vadd.xlane.f32.xlu0 %v1556
    %v1588 = vpop.xlane.xlu0 %1587
    %1589 = vadd.xlane.f32.xlu0 %v1558
    %v1590 = vpop.xlane.xlu0 %1589
    %1591 = vadd.xlane.f32.xlu0 %v1560
    %v1592 = vpop.xlane.xlu0 %1591
    %1593 = vadd.xlane.f32.xlu0 %v1562
    %v1594 = vpop.xlane.xlu0 %1593
    %1595 = vadd.xlane.f32.xlu0 %v1564
    %v1596 = vpop.xlane.xlu0 %1595
    %1597 = vadd.xlane.f32.xlu0 %v1566
    %v1598 = vpop.xlane.xlu0 %1597
    %1599 = vadd.xlane.f32.xlu0 %v1568
    %v1600 = vpop.xlane.xlu0 %1599
    %1601 = vadd.xlane.f32.xlu0 %v1570
    %v1602 = vpop.xlane.xlu0 %1601
    %v1603 = vrcp.pop %v1572
    %v1604 = vrcp.pop %v1574
    %v1605 = vrcp.pop %v1576
    %v1606 = vrcp.pop %v1578
    %v1607 = vrcp.pop %v1580
    %v1608 = vrcp.pop %v1582
    %v1609 = vrcp.pop %v1584
    %v1610 = vrcp.pop %v1586
    %v1611 = vrcp.pop %v1588
    %v1612 = vrcp.pop %v1590
    %v1613 = vrcp.pop %v1592
    %v1614 = vrcp.pop %v1594
    %v1615 = vrcp.pop %v1596
    %v1616 = vrcp.pop %v1598
    %v1617 = vrcp.pop %v1600
    %v1618 = vrcp.pop %v1602
    %v1619 = vpack.c.bf16 %v1542, %v1540
    %v1620 = vpack.c.bf16 %v1546, %v1544
    %v1621 = vpack.c.bf16 %v1550, %v1548
    %v1622 = vpack.c.bf16 %v1554, %v1552
    %v1623 = vpack.c.bf16 %v1558, %v1556
    %v1624 = vpack.c.bf16 %v1562, %v1560
    %v1625 = vpack.c.bf16 %v1566, %v1564
    %v1626 = vpack.c.bf16 %v1570, %v1568
    %v1643 = vunpack.c.l.b16 %v1157
    %v1644 = vunpack.c.l.b16 %v1158
    %v1645 = vunpack.c.l.b16 %v1159
    %v1646 = vunpack.c.l.b16 %v1160
    %v1647 = vunpack.c.l.b16 %v1161
    %v1648 = vunpack.c.l.b16 %v1162
    %v1649 = vunpack.c.l.b16 %v1163
    %v1650 = vunpack.c.l.b16 %v1164
    %v1651 = vunpack.c.l.b16 %v1165
    %v1652 = vunpack.c.l.b16 %v1166
    %v1653 = vunpack.c.l.b16 %v1167
    %v1654 = vunpack.c.l.b16 %v1168
    %v1655 = vunpack.c.l.b16 %v1169
    %v1656 = vunpack.c.l.b16 %v1170
    %v1657 = vunpack.c.l.b16 %v1171
    %v1658 = vunpack.c.l.b16 %v1172
    %v1659 = vpack.c.b16 %v1644, %v1643
    %v1660 = vpack.c.b16 %v1646, %v1645
    %v1661 = vpack.c.b16 %v1648, %v1647
    %v1662 = vpack.c.b16 %v1650, %v1649
    %v1663 = vpack.c.b16 %v1652, %v1651
    %v1664 = vpack.c.b16 %v1654, %v1653
    %v1665 = vpack.c.b16 %v1656, %v1655
    %v1666 = vpack.c.b16 %v1658, %v1657
    %1675 = vmatprep.subr.bf16.mxu0 0
    %1676 = vmatpush1.bf16.msra.mxu0 %v1666
    %1677 = vmatprep.subr.bf16.mxu0 0
    %1678 = vmatpush1.bf16.msra.mxu0 %v1665
    %1679 = vmatprep.subr.bf16.mxu0 0
    %1680 = vmatpush1.bf16.msra.mxu0 %v1664
    %1681 = vmatprep.subr.bf16.mxu0 0
    %1682 = vmatpush1.bf16.msra.mxu0 %v1663
    %1683 = vmatprep.subr.bf16.mxu0 0
    %1684 = vmatpush1.bf16.msra.mxu0 %v1662
    %1685 = vmatprep.subr.bf16.mxu0 0
    %1686 = vmatpush1.bf16.msra.mxu0 %v1661
    %1687 = vmatprep.subr.bf16.mxu0 0
    %1688 = vmatpush1.bf16.msra.mxu0 %v1660
    %1689 = vmatprep.subr.bf16.mxu0 0
    %1690 = vmatpush1.bf16.msra.mxu0 %v1659
    %1691 = vmatprep.subr.bf16.mxu0 0
    %1692 = vmatpush2.bf16.msra.mxu0 0
    %1693 = vmatprep.subr.bf16.mxu0 0
    %1694 = vmatpush2.bf16.msra.mxu0 0
    %1695 = vmatprep.subr.bf16.mxu0 0
    %1696 = vmatpush2.bf16.msra.mxu0 0
    %1697 = vmatprep.subr.bf16.mxu0 0
    %1698 = vmatpush2.bf16.msra.mxu0 0
    %1699 = vmatprep.subr.bf16.mxu0 0
    %1700 = vmatpush2.bf16.msra.mxu0 0
    %1701 = vmatprep.subr.bf16.mxu0 0
    %1702 = vmatpush2.bf16.msra.mxu0 0
    %1703 = vmatprep.subr.bf16.mxu0 0
    %1704 = vmatpush2.bf16.msra.mxu0 0
    %1705 = vmatprep.subr.bf16.mxu0 0
    %1706 = vmatpush2.bf16.msra.mxu0 0
    %1707 = vmatprep.mubr.bf16.mxu0 0
    %1708 = vmatmul.mubr.bf16.gmra.mxu0 %v1619
    %v1709 = vpop.f32.mrf.mxu0
    %v1710 = vadd.f32 0.0, %v1709
    %v1711 = vpop.f32.mrf.mxu0
    %v1712 = vpop.f32.mrf.mxu0
    %v1713 = vadd.f32 0.0, %v1712
    %v1714 = vpop.f32.mrf.mxu0
    %1715 = vmatprep.mubr.bf16.mxu0 0
    %1716 = vmatmul.mubr.bf16.gmra.mxu0 %v1620
    %v1717 = vpop.f32.mrf.mxu0
    %v1718 = vadd.f32 0.0, %v1717
    %v1719 = vpop.f32.mrf.mxu0
    %v1720 = vpop.f32.mrf.mxu0
    %v1721 = vadd.f32 0.0, %v1720
    %v1722 = vpop.f32.mrf.mxu0
    %1723 = vmatprep.mubr.bf16.mxu0 0
    %1724 = vmatmul.mubr.bf16.gmra.mxu0 %v1621
    %v1725 = vpop.f32.mrf.mxu0
    %v1726 = vadd.f32 0.0, %v1725
    %v1727 = vpop.f32.mrf.mxu0
    %v1728 = vpop.f32.mrf.mxu0
    %v1729 = vadd.f32 0.0, %v1728
    %v1730 = vpop.f32.mrf.mxu0
    %1731 = vmatprep.mubr.bf16.mxu0 0
    %1732 = vmatmul.mubr.bf16.gmra.mxu0 %v1622
    %v1733 = vpop.f32.mrf.mxu0
    %v1734 = vadd.f32 0.0, %v1733
    %v1735 = vpop.f32.mrf.mxu0
    %v1736 = vpop.f32.mrf.mxu0
    %v1737 = vadd.f32 0.0, %v1736
    %v1738 = vpop.f32.mrf.mxu0
    %1739 = vdwg.mxu0
    %v1756 = vunpack.c.l.b16 %v1173
    %v1757 = vunpack.c.l.b16 %v1174
    %v1758 = vunpack.c.l.b16 %v1175
    %v1759 = vunpack.c.l.b16 %v1176
    %v1760 = vunpack.c.l.b16 %v1177
    %v1761 = vunpack.c.l.b16 %v1178
    %v1762 = vunpack.c.l.b16 %v1179
    %v1763 = vunpack.c.l.b16 %v1180
    %v1764 = vunpack.c.l.b16 %v1181
    %v1765 = vunpack.c.l.b16 %v1182
    %v1766 = vunpack.c.l.b16 %v1183
    %v1767 = vunpack.c.l.b16 %v1184
    %v1768 = vunpack.c.l.b16 %v1185
    %v1769 = vunpack.c.l.b16 %v1186
    %v1770 = vunpack.c.l.b16 %v1187
    %v1771 = vunpack.c.l.b16 %v1188
    %v1772 = vpack.c.b16 %v1757, %v1756
    %v1773 = vpack.c.b16 %v1759, %v1758
    %v1774 = vpack.c.b16 %v1761, %v1760
    %v1775 = vpack.c.b16 %v1763, %v1762
    %v1776 = vpack.c.b16 %v1765, %v1764
    %v1777 = vpack.c.b16 %v1767, %v1766
    %v1778 = vpack.c.b16 %v1769, %v1768
    %v1779 = vpack.c.b16 %v1771, %v1770
    %1788 = vmatprep.subr.bf16.mxu0 0
    %1789 = vmatpush1.bf16.msra.mxu0 %v1779
    %1790 = vmatprep.subr.bf16.mxu0 0
    %1791 = vmatpush1.bf16.msra.mxu0 %v1778
    %1792 = vmatprep.subr.bf16.mxu0 0
    %1793 = vmatpush1.bf16.msra.mxu0 %v1777
    %1794 = vmatprep.subr.bf16.mxu0 0
    %1795 = vmatpush1.bf16.msra.mxu0 %v1776
    %1796 = vmatprep.subr.bf16.mxu0 0
    %1797 = vmatpush1.bf16.msra.mxu0 %v1775
    %1798 = vmatprep.subr.bf16.mxu0 0
    %1799 = vmatpush1.bf16.msra.mxu0 %v1774
    %1800 = vmatprep.subr.bf16.mxu0 0
    %1801 = vmatpush1.bf16.msra.mxu0 %v1773
    %1802 = vmatprep.subr.bf16.mxu0 0
    %1803 = vmatpush1.bf16.msra.mxu0 %v1772
    %1804 = vmatprep.subr.bf16.mxu0 0
    %1805 = vmatpush2.bf16.msra.mxu0 0
    %1806 = vmatprep.subr.bf16.mxu0 0
    %1807 = vmatpush2.bf16.msra.mxu0 0
    %1808 = vmatprep.subr.bf16.mxu0 0
    %1809 = vmatpush2.bf16.msra.mxu0 0
    %1810 = vmatprep.subr.bf16.mxu0 0
    %1811 = vmatpush2.bf16.msra.mxu0 0
    %1812 = vmatprep.subr.bf16.mxu0 0
    %1813 = vmatpush2.bf16.msra.mxu0 0
    %1814 = vmatprep.subr.bf16.mxu0 0
    %1815 = vmatpush2.bf16.msra.mxu0 0
    %1816 = vmatprep.subr.bf16.mxu0 0
    %1817 = vmatpush2.bf16.msra.mxu0 0
    %1818 = vmatprep.subr.bf16.mxu0 0
    %1819 = vmatpush2.bf16.msra.mxu0 0
    %1820 = vmatprep.mubr.bf16.mxu0 0
    %1821 = vmatmul.mubr.bf16.gmra.mxu0 %v1623
    %v1822 = vpop.f32.mrf.mxu0
    %v1823 = vadd.f32 0.0, %v1822
    %v1824 = vpop.f32.mrf.mxu0
    %v1825 = vpop.f32.mrf.mxu0
    %v1826 = vadd.f32 0.0, %v1825
    %v1827 = vpop.f32.mrf.mxu0
    %1828 = vmatprep.mubr.bf16.mxu0 0
    %1829 = vmatmul.mubr.bf16.gmra.mxu0 %v1624
    %v1830 = vpop.f32.mrf.mxu0
    %v1831 = vadd.f32 0.0, %v1830
    %v1832 = vpop.f32.mrf.mxu0
    %v1833 = vpop.f32.mrf.mxu0
    %v1834 = vadd.f32 0.0, %v1833
    %v1835 = vpop.f32.mrf.mxu0
    %1836 = vmatprep.mubr.bf16.mxu0 0
    %1837 = vmatmul.mubr.bf16.gmra.mxu0 %v1625
    %v1838 = vpop.f32.mrf.mxu0
    %v1839 = vadd.f32 0.0, %v1838
    %v1840 = vpop.f32.mrf.mxu0
    %v1841 = vpop.f32.mrf.mxu0
    %v1842 = vadd.f32 0.0, %v1841
    %v1843 = vpop.f32.mrf.mxu0
    %1844 = vmatprep.mubr.bf16.mxu0 0
    %1845 = vmatmul.mubr.bf16.gmra.mxu0 %v1626
    %v1846 = vpop.f32.mrf.mxu0
    %v1847 = vadd.f32 0.0, %v1846
    %v1848 = vpop.f32.mrf.mxu0
    %v1849 = vpop.f32.mrf.mxu0
    %v1850 = vadd.f32 0.0, %v1849
    %v1851 = vpop.f32.mrf.mxu0
    %1852 = vdwg.mxu0
    %v1853 = vmul.f32 %v1710, %v1603
    %v1854 = vmul.f32 %v1713, %v1604
    %v1855 = vmul.f32 %v1718, %v1605
    %v1856 = vmul.f32 %v1721, %v1606
    %v1857 = vmul.f32 %v1726, %v1607
    %v1858 = vmul.f32 %v1729, %v1608
    %v1859 = vmul.f32 %v1734, %v1609
    %v1860 = vmul.f32 %v1737, %v1610
    %v1861 = vmul.f32 %v1823, %v1611
    %v1862 = vmul.f32 %v1826, %v1612
    %v1863 = vmul.f32 %v1831, %v1613
    %v1864 = vmul.f32 %v1834, %v1614
    %v1865 = vmul.f32 %v1839, %v1615
    %v1866 = vmul.f32 %v1842, %v1616
    %v1867 = vmul.f32 %v1847, %v1617
    %v1868 = vmul.f32 %v1850, %v1618
    %v1869 = vpack.c.bf16 %v1854, %v1853
    %v1870 = vpack.c.bf16 %v1856, %v1855
    %v1871 = vpack.c.bf16 %v1858, %v1857
    %v1872 = vpack.c.bf16 %v1860, %v1859
    %v1873 = vpack.c.bf16 %v1862, %v1861
    %v1874 = vpack.c.bf16 %v1864, %v1863
    %v1875 = vpack.c.bf16 %v1866, %v1865
    %v1876 = vpack.c.bf16 %v1868, %v1867
    %v1885 = vunpack.c.l.b16 %v1869
    %v1886 = vunpack.c.h.b16 %v1869
    %v1887 = vunpack.c.l.b16 %v1870
    %v1888 = vunpack.c.h.b16 %v1870
    %v1889 = vunpack.c.l.b16 %v1871
    %v1890 = vunpack.c.h.b16 %v1871
    %v1891 = vunpack.c.l.b16 %v1872
    %v1892 = vunpack.c.h.b16 %v1872
    %v1893 = vunpack.c.l.b16 %v1873
    %v1894 = vunpack.c.h.b16 %v1873
    %v1895 = vunpack.c.l.b16 %v1874
    %v1896 = vunpack.c.h.b16 %v1874
    %v1897 = vunpack.c.l.b16 %v1875
    %v1898 = vunpack.c.h.b16 %v1875
    %v1899 = vunpack.c.l.b16 %v1876
    %v1900 = vunpack.c.h.b16 %v1876
    %v1901 = vpack.c.b16 %v1885, %v1885
    %v1902 = vpack.c.b16 %v1886, %v1886
    %v1903 = vpack.c.b16 %v1887, %v1887
    %v1904 = vpack.c.b16 %v1888, %v1888
    %v1905 = vpack.c.b16 %v1889, %v1889
    %v1906 = vpack.c.b16 %v1890, %v1890
    %v1907 = vpack.c.b16 %v1891, %v1891
    %v1908 = vpack.c.b16 %v1892, %v1892
    %v1909 = vpack.c.b16 %v1893, %v1893
    %v1910 = vpack.c.b16 %v1894, %v1894
    %v1911 = vpack.c.b16 %v1895, %v1895
    %v1912 = vpack.c.b16 %v1896, %v1896
    %v1913 = vpack.c.b16 %v1897, %v1897
    %v1914 = vpack.c.b16 %v1898, %v1898
    %v1915 = vpack.c.b16 %v1899, %v1899
    %v1916 = vpack.c.b16 %v1900, %v1900
    %vm1933 = vcmask 519168
    %1934 = vst.msk [vmem:[#allocation4] sm:$0xf] %vm1933, %v1901
    %1935 = vst.msk [vmem:[#allocation4 + $0x4] sm:$0xf] %vm1933, %v1902
    %1936 = vst.msk [vmem:[#allocation4 + $0x8] sm:$0xf] %vm1933, %v1903
    %1937 = vst.msk [vmem:[#allocation4 + $0xc] sm:$0xf] %vm1933, %v1904
    %1938 = vst.msk [vmem:[#allocation4 + $0x10] sm:$0xf] %vm1933, %v1905
    %1939 = vst.msk [vmem:[#allocation4 + $0x14] sm:$0xf] %vm1933, %v1906
    %1940 = vst.msk [vmem:[#allocation4 + $0x18] sm:$0xf] %vm1933, %v1907
    %1941 = vst.msk [vmem:[#allocation4 + $0x1c] sm:$0xf] %vm1933, %v1908
    %1942 = vst.msk [vmem:[#allocation4 + $0x20] sm:$0xf] %vm1933, %v1909
    %1943 = vst.msk [vmem:[#allocation4 + $0x24] sm:$0xf] %vm1933, %v1910
    %1944 = vst.msk [vmem:[#allocation4 + $0x28] sm:$0xf] %vm1933, %v1911
    %1945 = vst.msk [vmem:[#allocation4 + $0x2c] sm:$0xf] %vm1933, %v1912
    %1946 = vst.msk [vmem:[#allocation4 + $0x30] sm:$0xf] %vm1933, %v1913
    %1947 = vst.msk [vmem:[#allocation4 + $0x34] sm:$0xf] %vm1933, %v1914
    %1948 = vst.msk [vmem:[#allocation4 + $0x38] sm:$0xf] %vm1933, %v1915
    %1949 = vst.msk [vmem:[#allocation4 + $0x3c] sm:$0xf] %vm1933, %v1916
    // Predicated region
    $region26: #{tpu_custom_call.1} parent=1 // pred_check
      _
    $region27: #{tpu_custom_call.1} parent=1 // pred_check_branch
      %1951 = sbr.rel (0) target = $region29
    $region28: #{tpu_custom_call.1} parent=1 // pred_region
      %s1953 = ssub.s32 1024, 1024
      %1954 = vsyncadd [#allocation5], %s1953
      %s1955 = sshll.u32 [#allocation4], 4
      %s1956 = int_to_ptr.vmem [resolvable:$true] %s1955
      %1961 = dma.vmem_to_hbm [thread:$0]  %s1956, 1024, %s5, [#allocation5], 64, 64, 4
    $region29: #{tpu_custom_call.1} parent=1 // pred_fallthru
      _
    // Predicated region
    $region30: #{tpu_custom_call.1} parent=1 // pred_check
      _
    $region31: #{tpu_custom_call.1} parent=1 // pred_check_branch
      %1963 = sbr.rel (0) target = $region33
    $region32: #{tpu_custom_call.1} parent=1 // pred_region
      %1964 = dma.done [#allocation5], 1024
    $region33: #{tpu_custom_call.1} parent=1 // pred_fallthru
      _
    %1965 = vsyncpa [#allocation5], 1

</llo_original>
